<compile_context>
chip_gen: v5e
topology: v5e:2x2
jax: 0.10.0
libtpu: 0.0.40
codegen_flags: <defaults>
</compile_context>

<pallas_src>
import math

import numpy as np
import jax
import jax.numpy as jnp
from jax import lax
from jax.experimental import pallas as pl
from jax.experimental.pallas import tpu as pltpu

# ---------------- configuration (small, consistent with the module) -------------
CONST_SCALE = 0.18215
IMG_DIM = 64                  # stand-in for 512 (keeps shapes small)
LAT_H = IMG_DIM // 8          # 8
LAT_W = IMG_DIM // 8          # 8
LAT_C = 4                     # unet.in_channels
LAT_L = LAT_H * LAT_W         # 64 latent "tokens"
SEQ = 8                       # tokenizer max_length stand-in (real: 77)
EMBED = 32                    # text embed dim stand-in (real: 768)
HID = 32                      # unet hidden dim
VOCAB = 128
NUM_TRAIN_TIMESTEPS = 1000
_SC_W = 8                     # scalars per step in the 1-D SMEM table


# =========================== Pallas kernels =====================================

def text_encoder_kernel(e_ref, w_ref, b_ref, o_ref):
    """Synthetic text encoder over the whole (N*SEQ, EMBED) slab: tanh(emb @ W + b).

    Used only by the standalone get_text_embeds API path; the main pipeline runs
    the encoder fused inside the diffusion kernel's step==0 pre-pass."""
    h = jnp.dot(e_ref[...], w_ref[...], preferred_element_type=jnp.float32)
    o_ref[...] = jnp.tanh(h + b_ref[...])


def _make_fused_kernel(encode_text: bool):
    """Fused (optional text-encode) + diffusion loop + VAE channel-decode.

    grid = (B, T): axis 0 = batch ("parallel", megacore-shardable), axis 1 = step
    ("arbitrary", output block revisited).  Per-b latents and K/V live in VMEM
    scratch; outputs are written only on the final step of each b.

    kernel args (after scalar prefetch sc_ref, 1-D SMEM, 8 floats per step:
      [c1, c2, g, 1-g, 0,0,0,0] where c1=sqrt(a_prev)/sqrt(a_t),
      c2=sqrt(1-a_prev)-c1*sqrt(1-a_t)):
      lat0   (1, L, C)        initial latents for this b
      txt    (1, 2S, E)       [uncond ; cond] rows: raw token embeddings if
                              encode_text else already-encoded text embeddings
      tn     (T, 1, C)        precomputed t_noise = tanh(temb@wt)@wo, resident
      (txt_w (E,E), txt_b (1,E) only if encode_text)
      wq (C,HID) wk (E,HID) wv (E,HID) wo (HID,C) vae_w (C,3) vae_b (1,3)
      outputs: lat_out (1, L, C), img_out (1, L, 3)
      scratch: lat_scr (L, C), k_scr (2S, HID), v_scr (2S, HID)
    """
    inv_sqrt_hid = 1.0 / math.sqrt(float(HID))

    def _impl(sc_ref, lat0_ref, txt_ref, tn_ref, txt_w_ref, txt_b_ref,
              wq_ref, wk_ref, wv_ref, wo_ref, vae_w_ref, vae_b_ref,
              lat_out_ref, img_out_ref, lat_scr, k_scr, v_scr):
        step = pl.program_id(1)
        last = pl.num_programs(1) - 1

        # ---- step==0 pre-pass: init resident latents, (encode text,) hoist K/V.
        @pl.when(step == 0)
        def _():
            lat_scr[...] = lat0_ref[0]
            txt = txt_ref[0]                                             # (2S, E)
            if encode_text:
                txt = jnp.tanh(
                    jnp.dot(txt, txt_w_ref[...],
                            preferred_element_type=jnp.float32) + txt_b_ref[...])
            k_scr[...] = jnp.dot(txt, wk_ref[...],
                                 preferred_element_type=jnp.float32)     # (2S, HID)
            v_scr[...] = jnp.dot(txt, wv_ref[...],
                                 preferred_element_type=jnp.float32)     # (2S, HID)

        # ---- per-step scheduler scalars (1-D SMEM, flattened).
        base = step * _SC_W
        c1 = sc_ref[base + 0]
        c2 = sc_ref[base + 1]
        g = sc_ref[base + 2]
        one_m_g = sc_ref[base + 3]

        x = lat_scr[...]                                                 # (L, C)

        # q = x @ wq : contraction dim 4 -> unrolled VPU MAC instead of MXU.
        q = x[:, 0:1] * wq_ref[0:1, :]
        for c in range(1, LAT_C):
            q = q + x[:, c:c + 1] * wq_ref[c:c + 1, :]                   # (L, HID)

        # Single score dot over both CFG branches; dot_general contracts HID
        # directly (no .T -> no XLU transpose).
        s = lax.dot_general(q, k_scr[...],
                            dimension_numbers=(((1,), (1,)), ((), ())),
                            preferred_element_type=jnp.float32) * inv_sqrt_hid  # (L, 2S)

        # Per-half softmax with the CFG combine folded into the normalization:
        #   p = [(1-g)*softmax(s_u) , g*softmax(s_c)]  (lane mask, no slicing/concat)
        lane = lax.broadcasted_iota(jnp.int32, s.shape, 1)
        is_u = lane < SEQ
        neg = jnp.float32(-1e30)
        m_u = jnp.max(jnp.where(is_u, s, neg), axis=-1, keepdims=True)
        m_c = jnp.max(jnp.where(is_u, neg, s), axis=-1, keepdims=True)
        e = jnp.exp(s - jnp.where(is_u, m_u, m_c))
        sum_u = jnp.sum(jnp.where(is_u, e, 0.0), axis=-1, keepdims=True)
        sum_c = jnp.sum(jnp.where(is_u, 0.0, e), axis=-1, keepdims=True)
        # NOTE: approx reciprocal -> attention rows sum to ~1 (surrogate tolerance).
        r = jnp.where(is_u,
                      one_m_g * pl.reciprocal(sum_u, approx=True),
                      g * pl.reciprocal(sum_c, approx=True))
        p = e * r                                                        # (L, 2S)

        # One PV dot over both branches, then the (linear) output projection.
        # CFG-in-HID identity holds because wo is linear and t_proj cancels in the
        # branch difference; t_noise = tanh(temb@wt)@wo is the host-precomputed table.
        h = jnp.dot(p, v_scr[...], preferred_element_type=jnp.float32)   # (L, HID)
        noise = jnp.dot(h, wo_ref[...],
                        preferred_element_type=jnp.float32) + tn_ref[step]  # (L, C)

        # DDIM-style scheduler step, reduced to two fused coefficients.
        lat_scr[...] = c1 * x + c2 * noise

        # ---- final step: write latents + VAE channel-decode.
        @pl.when(step == last)
        def _():
            lat_out_ref[0] = lat_scr[...]
            z = lat_scr[...] * (1.0 / CONST_SCALE)                       # (L, C)
            y = z[:, 0:1] * vae_w_ref[0:1, :]
            for c in range(1, LAT_C):
                y = y + z[:, c:c + 1] * vae_w_ref[c:c + 1, :]            # (L, 3)
            y = y + vae_b_ref[...]
            img_out_ref[0] = jnp.clip(y * 0.5 + 0.5, 0.0, 1.0)

    if encode_text:
        def kernel(sc, lat0, emb, tn, tw, tb, wq, wk, wv, wo, vw, vb,
                   lat_out, img_out, lat_scr, k_scr, v_scr):
            _impl(sc, lat0, emb, tn, tw, tb, wq, wk, wv, wo, vw, vb,
                  lat_out, img_out, lat_scr, k_scr, v_scr)
    else:
        def kernel(sc, lat0, txt, tn, wq, wk, wv, wo, vw, vb,
                   lat_out, img_out, lat_scr, k_scr, v_scr):
            _impl(sc, lat0, txt, tn, None, None, wq, wk, wv, wo, vw, vb,
                  lat_out, img_out, lat_scr, k_scr, v_scr)
    return kernel


def vae_decode_kernel(lat_ref, w_ref, b_ref, img_ref):
    """Standalone VAE decode (used only by the latents_to_img API path)."""
    x = lat_ref[...] * (1.0 / CONST_SCALE)                               # (P, 4)
    y = x[:, 0:1] * w_ref[0:1, :]
    for c in range(1, LAT_C):
        y = y + x[:, c:c + 1] * w_ref[c:c + 1, :]
    img_ref[...] = jnp.clip((y + b_ref[...]) * 0.5 + 0.5, 0.0, 1.0)      # (P, 3)


# =========================== wrappers (pallas_call glue) ========================

def run_text_encoder(emb, w, b):
    """emb: (N, SEQ, EMBED) -> (N, SEQ, EMBED). Single un-gridded invocation."""
    n = emb.shape[0]
    flat = emb.reshape(n * SEQ, EMBED)
    out = pl.pallas_call(
        text_encoder_kernel,
        out_shape=jax.ShapeDtypeStruct((n * SEQ, EMBED), jnp.float32),
        in_specs=[pl.BlockSpec(memory_space=pltpu.MemorySpace.VMEM)] * 3,
        out_specs=pl.BlockSpec(memory_space=pltpu.MemorySpace.VMEM),
    )(flat, w, b)
    return out.reshape(n, SEQ, EMBED)


def run_fused(lat_tok, txt_pair, t_noise, step_scalars, p, *, encode_text):
    """One pallas_call for (optional text-encode) + diffusion loop + decode.

    lat_tok      (B, L, C)    initial latents as tokens
    txt_pair     (B, 2S, E)   per-prompt [uncond ; cond] (raw token embeddings if
                              encode_text, else encoded text embeddings)
    t_noise      (T, 1, C)    precomputed tanh(temb@wt)@wo table (resident)
    step_scalars (T*8,)       flat per-step scheduler scalars (SMEM scalar prefetch)
    returns (final latents (B, L, C), decoded small image (B, L, 3))
    """
    B, L, C = lat_tok.shape
    T = t_noise.shape[0]
    kernel = _make_fused_kernel(encode_text)
    const2d = lambda b, t, sc: (0, 0)

    in_specs = [
        pl.BlockSpec((1, L, C), lambda b, t, sc: (b, 0, 0)),             # lat0
        pl.BlockSpec((1, 2 * SEQ, EMBED), lambda b, t, sc: (b, 0, 0)),   # txt/emb pair
        pl.BlockSpec((T, 1, LAT_C), lambda b, t, sc: (0, 0, 0)),         # t_noise table
    ]
    args = [lat_tok, txt_pair, t_noise]
    if encode_text:
        in_specs += [pl.BlockSpec((EMBED, EMBED), const2d),              # txt_w
                     pl.BlockSpec((1, EMBED), const2d)]                  # txt_b
        args += [p["txt_w"], p["txt_b"]]
    in_specs += [
        pl.BlockSpec((LAT_C, HID), const2d),                             # wq
        pl.BlockSpec((EMBED, HID), const2d),                             # wk
        pl.BlockSpec((EMBED, HID), const2d),                             # wv
        pl.BlockSpec((HID, LAT_C), const2d),                             # wo
        pl.BlockSpec((LAT_C, 3), const2d),                               # vae_w
        pl.BlockSpec((1, 3), const2d),                                   # vae_b
    ]
    args += [p["wq"], p["wk"], p["wv"], p["wo"], p["vae_w"], p["vae_b"]]

    grid_spec = pltpu.PrefetchScalarGridSpec(
        num_scalar_prefetch=1,
        grid=(B, T),
        in_specs=in_specs,
        out_specs=[pl.BlockSpec((1, L, C), lambda b, t, sc: (b, 0, 0)),
                   pl.BlockSpec((1, L, 3), lambda b, t, sc: (b, 0, 0))],
        scratch_shapes=[pltpu.VMEM((L, C), jnp.float32),                 # resident latents
                        pltpu.VMEM((2 * SEQ, HID), jnp.float32),         # hoisted K
                        pltpu.VMEM((2 * SEQ, HID), jnp.float32)],        # hoisted V
    )

    lat_out, img_out = pl.pallas_call(
        kernel,
        out_shape=(jax.ShapeDtypeStruct((B, L, C), jnp.float32),
                   jax.ShapeDtypeStruct((B, L, 3), jnp.float32)),
        grid_spec=grid_spec,
        compiler_params=pltpu.CompilerParams(
            dimension_semantics=("parallel", "arbitrary")),
    )(step_scalars, *args)
    return lat_out, img_out


def _upsample_x8(img_small, bs):
    """(B, L, 3) -> (B, H, W, 3) via reshape/broadcast (no gather codegen)."""
    img = img_small.reshape(bs, LAT_H, 1, LAT_W, 1, 3)
    img = jnp.broadcast_to(img, (bs, LAT_H, 8, LAT_W, 8, 3))
    return img.reshape(bs, LAT_H * 8, LAT_W * 8, 3)


def _pipeline(ids, latents_nchw, temb, step_scalars, params):
    """Full jitted prompt->image path: one fused pallas_call + cheap XLA glue."""
    bs = ids.shape[0] // 2
    emb = params["vocab"][ids]                                           # (2B, S, E)
    emb_pair = jnp.concatenate([emb[:bs], emb[bs:]], axis=1)             # (B, 2S, E)

    # host-side-of-the-kernel precompute: per-step t_noise table (drops wt/temb
    # and the per-step tanh/MXU push from the kernel entirely).
    t_noise = (jnp.tanh(temb @ params["wt"]) @ params["wo"]).reshape(-1, 1, LAT_C)

    lat_tok = jnp.transpose(latents_nchw, (0, 2, 3, 1)).reshape(bs, LAT_L, LAT_C)
    lat_out, img_small = run_fused(lat_tok, emb_pair, t_noise, step_scalars,
                                   params, encode_text=True)

    latents_final = jnp.transpose(lat_out.reshape(bs, LAT_H, LAT_W, LAT_C),
                                  (0, 3, 1, 2))
    img_u8 = jnp.round(_upsample_x8(img_small, bs) * 255.0).astype(jnp.uint8)
    return latents_final, img_u8


_pipeline_jit = jax.jit(_pipeline)


# =========================== Stable Diffusion surrogate =========================

class StableDiffusionPallas:
    def __init__(self, num_train_timesteps: int = NUM_TRAIN_TIMESTEPS):
        self.num_train_timesteps = num_train_timesteps
        self.min_step = int(num_train_timesteps * 0.02)
        self.max_step = int(num_train_timesteps * 0.98)

        # PNDM scaled_linear betas -> alphas_cumprod (same formula as diffusers)
        betas = np.linspace(0.00085 ** 0.5, 0.012 ** 0.5,
                            num_train_timesteps, dtype=np.float64) ** 2
        self.alphas_cumprod = np.cumprod(1.0 - betas)

        # deterministic synthetic parameters
        key = jax.random.PRNGKey(0)
        ks = jax.random.split(key, 10)
        s = 0.2
        self.params = {
            "vocab": jax.random.normal(ks[0], (VOCAB, EMBED), jnp.float32) * s,
            "txt_w": jax.random.normal(ks[1], (EMBED, EMBED), jnp.float32) * s,
            "txt_b": jax.random.normal(ks[2], (1, EMBED), jnp.float32) * s,
            "wq": jax.random.normal(ks[3], (LAT_C, HID), jnp.float32) * s,
            "wk": jax.random.normal(ks[4], (EMBED, HID), jnp.float32) * s,
            "wv": jax.random.normal(ks[5], (EMBED, HID), jnp.float32) * s,
            "wt": jax.random.normal(ks[6], (HID, HID), jnp.float32) * s,
            "wo": jax.random.normal(ks[7], (HID, LAT_C), jnp.float32) * s,
            "vae_w": jax.random.normal(ks[8], (LAT_C, 3), jnp.float32) * s,
            "vae_b": jax.random.normal(ks[9], (1, 3), jnp.float32) * s,
        }
        self._latent_key = jax.random.PRNGKey(1)

    # ---- tokenizer + text encoder -------------------------------------------------
    def _tokenize(self, prompt: str):
        ids = [(ord(c) % (VOCAB - 1)) + 1 for c in prompt][:SEQ]
        ids = ids + [0] * (SEQ - len(ids))
        return jnp.array(ids, dtype=jnp.int32)

    def _token_ids(self, prompts, negative_prompts):
        prompts = [prompts] if isinstance(prompts, str) else list(prompts)
        negative_prompts = ([negative_prompts] if isinstance(negative_prompts, str)
                            else list(negative_prompts))
        if len(negative_prompts) == 1 and len(prompts) > 1:
            negative_prompts = negative_prompts * len(prompts)
        ids_cond = jnp.stack([self._tokenize(p) for p in prompts])             # (B, SEQ)
        ids_uncond = jnp.stack([self._tokenize(p) for p in negative_prompts])  # (B, SEQ)
        # [uncond, cond] concat, like torch.cat([uncond_embeddings, text_embeddings])
        return jnp.concatenate([ids_uncond, ids_cond], axis=0)                 # (2B, SEQ)

    def get_text_embeds(self, prompts, negative_prompts):
        ids = self._token_ids(prompts, negative_prompts)
        emb = self.params["vocab"][ids]
        return run_text_encoder(emb, self.params["txt_w"], self.params["txt_b"])

    # ---- host-side scheduler tables -----------------------------------------------
    def _schedule_tables(self, num_inference_steps, guidance_scale):
        step_ratio = self.num_train_timesteps // num_inference_steps
        timesteps = list(range(self.num_train_timesteps - 1, -1,
                               -step_ratio))[:num_inference_steps]
        half = HID // 2
        freqs = np.exp(-math.log(10000.0) * np.arange(half, dtype=np.float64) / half)
        rows, tembs = [], []
        for t in timesteps:
            a_t = float(self.alphas_cumprod[t])
            t_prev = t - step_ratio
            # alpha_prev falls back to 1.0 when t_prev goes negative on the last step
            # (assumes num_inference_steps relates evenly to num_train_timesteps).
            a_prev = float(self.alphas_cumprod[t_prev]) if t_prev >= 0 else 1.0
            c1 = math.sqrt(a_prev) / math.sqrt(a_t)
            c2 = math.sqrt(1.0 - a_prev) - c1 * math.sqrt(1.0 - a_t)
            rows.append([c1, c2, float(guidance_scale),
                         1.0 - float(guidance_scale), 0.0, 0.0, 0.0, 0.0])
            ang = t * freqs
            tembs.append(np.concatenate([np.sin(ang), np.cos(ang)]))
        step_scalars = jnp.asarray(np.array(rows, dtype=np.float32).reshape(-1))  # (T*8,)
        temb = jnp.asarray(np.array(tembs, dtype=np.float32))                     # (T, HID)
        return step_scalars, temb

    # ---- diffusion loop (API-compatible; uses the fused kernel) ---------------------
    def produce_latents(self, text_embeddings, height=IMG_DIM, width=IMG_DIM,
                        num_inference_steps=4, guidance_scale=7.5, latents=None):
        bs = text_embeddings.shape[0] // 2
        if latents is None:
            latents = jax.random.normal(
                self._latent_key, (bs, LAT_C, height // 8, width // 8), jnp.float32)
        step_scalars, temb = self._schedule_tables(num_inference_steps, guidance_scale)
        t_noise = (jnp.tanh(temb @ self.params["wt"])
                   @ self.params["wo"]).reshape(-1, 1, LAT_C)
        txt_pair = jnp.concatenate([text_embeddings[:bs], text_embeddings[bs:]], axis=1)
        lat_tok = jnp.transpose(latents, (0, 2, 3, 1)).reshape(bs, LAT_L, LAT_C)
        lat_out, _ = run_fused(lat_tok, txt_pair, t_noise, step_scalars,
                               self.params, encode_text=False)
        return jnp.transpose(lat_out.reshape(bs, LAT_H, LAT_W, LAT_C), (0, 3, 1, 2))

    # ---- VAE decode (API-compatible standalone path) --------------------------------
    def latents_to_img(self, latents):
        b = latents.shape[0]
        flat = jnp.transpose(latents, (0, 2, 3, 1)).reshape(b * LAT_L, LAT_C)
        img_flat = pl.pallas_call(
            vae_decode_kernel,
            out_shape=jax.ShapeDtypeStruct((b * LAT_L, 3), jnp.float32),
            in_specs=[pl.BlockSpec(memory_space=pltpu.MemorySpace.VMEM)] * 3,
            out_specs=pl.BlockSpec(memory_space=pltpu.MemorySpace.VMEM),
        )(flat, self.params["vae_w"], self.params["vae_b"])
        return _upsample_x8(img_flat.reshape(b, LAT_L, 3), b)

    # ---- full forward (single fused pallas_call under one jit) ----------------------
    def prompt_to_img(self, prompts, negative_prompts="", num_inference_steps=4,
                      guidance_scale=7.5, latents=None):
        ids = self._token_ids(prompts, negative_prompts)
        bs = ids.shape[0] // 2
        if latents is None:
            latents = jax.random.normal(
                self._latent_key, (bs, LAT_C, LAT_H, LAT_W), jnp.float32)
        step_scalars, temb = self._schedule_tables(num_inference_steps, guidance_scale)
        _, img_u8 = _pipeline_jit(ids, latents, temb, step_scalars, self.params)
        img_u8 = jax.block_until_ready(img_u8)
        return np.asarray(img_u8)                                        # (B, H, W, 3) uint8

    def forward(self, prompts, negative_prompts="", num_inference_steps=4,
                guidance_scale=7.5, latents=None):
        return self.prompt_to_img(prompts, negative_prompts, num_inference_steps,
                                  guidance_scale, latents)


# =========================== main ===============================================

if __name__ == "__main__":
    sd = StableDiffusionPallas()

    # deterministic example inputs (batch=2 exercises the parallel batch grid axis)
    key = jax.random.PRNGKey(0)
    init_latents = jax.random.normal(key, (2, LAT_C, LAT_H, LAT_W), jnp.float32)

    img = sd.forward(["a photograph of an astronaut riding a horse",
                      "a watercolor painting of a fox in a forest"],
                     negative_prompts="",
                     num_inference_steps=4,
                     guidance_scale=7.5,
                     latents=init_latents)

    assert img.shape == (2, IMG_DIM, IMG_DIM, 3), img.shape
    assert img.dtype == np.uint8
    print("KERNEL_OK")
</pallas_src>

<mosaic_0001>
module attributes {stable_mosaic.version = 11 : i64} {
  func.func @kernel(%arg0: i32, %arg1: i32, %arg2: memref<32xf32, #tpu.memory_space<smem>>, %arg3: memref<1x64x4xf32, #tpu.memory_space<vmem>>, %arg4: memref<1x16x32xf32, #tpu.memory_space<vmem>>, %arg5: memref<4x1x4xf32, #tpu.memory_space<vmem>>, %arg6: memref<32x32xf32, #tpu.memory_space<vmem>>, %arg7: memref<1x32xf32, #tpu.memory_space<vmem>>, %arg8: memref<4x32xf32, #tpu.memory_space<vmem>>, %arg9: memref<32x32xf32, #tpu.memory_space<vmem>>, %arg10: memref<32x32xf32, #tpu.memory_space<vmem>>, %arg11: memref<32x4xf32, #tpu.memory_space<vmem>>, %arg12: memref<4x3xf32, #tpu.memory_space<vmem>>, %arg13: memref<1x3xf32, #tpu.memory_space<vmem>>, %arg14: memref<1x64x4xf32, #tpu.memory_space<vmem>>, %arg15: memref<1x64x3xf32, #tpu.memory_space<vmem>>, %arg16: memref<64x4xf32, #tpu.memory_space<vmem>>, %arg17: memref<16x32xf32, #tpu.memory_space<vmem>>, %arg18: memref<16x32xf32, #tpu.memory_space<vmem>>) attributes {dimension_semantics = [#tpu.dimension_semantics<parallel>, #tpu.dimension_semantics<arbitrary>], iteration_bounds = array<i64: 2, 4>, scalar_prefetch = 1 : i64, scratch_operands = 3 : i64, tpu.core_type = #tpu.core_type<tc>, window_params = [{transform_indices = @transform_0, window_bounds = array<i64: 1, 64, 4>}, {transform_indices = @transform_1, window_bounds = array<i64: 1, 16, 32>}, {pipeline_mode = #tpu.pipeline_mode<synchronous>, transform_indices = @transform_2, window_bounds = array<i64: 4, 1, 4>}, {pipeline_mode = #tpu.pipeline_mode<synchronous>, transform_indices = @transform_3, window_bounds = array<i64: 32, 32>}, {pipeline_mode = #tpu.pipeline_mode<synchronous>, transform_indices = @transform_4, window_bounds = array<i64: 1, 32>}, {pipeline_mode = #tpu.pipeline_mode<synchronous>, transform_indices = @transform_5, window_bounds = array<i64: 4, 32>}, {pipeline_mode = #tpu.pipeline_mode<synchronous>, transform_indices = @transform_6, window_bounds = array<i64: 32, 32>}, {pipeline_mode = #tpu.pipeline_mode<synchronous>, transform_indices = @transform_7, window_bounds = array<i64: 32, 32>}, {pipeline_mode = #tpu.pipeline_mode<synchronous>, transform_indices = @transform_8, window_bounds = array<i64: 32, 4>}, {pipeline_mode = #tpu.pipeline_mode<synchronous>, transform_indices = @transform_9, window_bounds = array<i64: 4, 3>}, {pipeline_mode = #tpu.pipeline_mode<synchronous>, transform_indices = @transform_10, window_bounds = array<i64: 1, 3>}, {transform_indices = @transform_11, window_bounds = array<i64: 1, 64, 4>}, {transform_indices = @transform_12, window_bounds = array<i64: 1, 64, 3>}]} {
    %c0_i32 = arith.constant 0 : i32
    %0 = arith.cmpi eq, %arg1, %c0_i32 : i32
    %1 = arith.extui %0 : i1 to i32
    %c0_i32_0 = arith.constant 0 : i32
    %2 = arith.cmpi ne, %1, %c0_i32_0 : i32
    scf.if %2 {
      %c0_32 = arith.constant 0 : index
      %c0_33 = arith.constant 0 : index
      %c0_34 = arith.constant 0 : index
      %100 = vector.load %arg3[%c0_32, %c0_33, %c0_34] : memref<1x64x4xf32, #tpu.memory_space<vmem>>, vector<1x64x4xf32>
      %101 = vector.shape_cast %100 : vector<1x64x4xf32> to vector<64x4xf32>
      %c0_35 = arith.constant 0 : index
      %c0_36 = arith.constant 0 : index
      %102 = vector.load %arg16[%c0_35, %c0_36] : memref<64x4xf32, #tpu.memory_space<vmem>>, vector<64x4xf32>
      tpu.vector_store %arg16[%c0_35, %c0_36], %101 {strides = array<i32>} : memref<64x4xf32, #tpu.memory_space<vmem>>, vector<64x4xf32>,
      %c0_37 = arith.constant 0 : index
      %c0_38 = arith.constant 0 : index
      %c0_39 = arith.constant 0 : index
      %103 = vector.load %arg4[%c0_37, %c0_38, %c0_39] : memref<1x16x32xf32, #tpu.memory_space<vmem>>, vector<1x16x32xf32>
      %104 = vector.shape_cast %103 : vector<1x16x32xf32> to vector<16x32xf32>
      %c0_40 = arith.constant 0 : index
      %c0_41 = arith.constant 0 : index
      %105 = vector.load %arg6[%c0_40, %c0_41] : memref<32x32xf32, #tpu.memory_space<vmem>>, vector<32x32xf32>
      %cst_42 = arith.constant dense<0.000000e+00> : vector<16x32xf32>
      %106 = tpu.matmul %104, %105, %cst_42 {dimension_numbers = #tpu.dot_dimension_numbers<[1], [0], [0], [1], [0, 0, 1, 1], [], []>} : vector<16x32xf32>, vector<32x32xf32>, vector<16x32xf32> -> vector<16x32xf32>
      %c0_43 = arith.constant 0 : index
      %c0_44 = arith.constant 0 : index
      %107 = vector.load %arg7[%c0_43, %c0_44] : memref<1x32xf32, #tpu.memory_space<vmem>>, vector<1x32xf32>
      %108 = vector.broadcast %107 : vector<1x32xf32> to vector<16x32xf32>
      %109 = arith.addf %106, %108 : vector<16x32xf32>
      %110 = math.tanh %109 : vector<16x32xf32>
      %c0_45 = arith.constant 0 : index
      %c0_46 = arith.constant 0 : index
      %111 = vector.load %arg9[%c0_45, %c0_46] : memref<32x32xf32, #tpu.memory_space<vmem>>, vector<32x32xf32>
      %cst_47 = arith.constant dense<0.000000e+00> : vector<16x32xf32>
      %112 = tpu.matmul %110, %111, %cst_47 {dimension_numbers = #tpu.dot_dimension_numbers<[1], [0], [0], [1], [0, 0, 1, 1], [], []>} : vector<16x32xf32>, vector<32x32xf32>, vector<16x32xf32> -> vector<16x32xf32>
      %c0_48 = arith.constant 0 : index
      %c0_49 = arith.constant 0 : index
      %113 = vector.load %arg17[%c0_48, %c0_49] : memref<16x32xf32, #tpu.memory_space<vmem>>, vector<16x32xf32>
      tpu.vector_store %arg17[%c0_48, %c0_49], %112 {strides = array<i32>} : memref<16x32xf32, #tpu.memory_space<vmem>>, vector<16x32xf32>,
      %c0_50 = arith.constant 0 : index
      %c0_51 = arith.constant 0 : index
      %114 = vector.load %arg10[%c0_50, %c0_51] : memref<32x32xf32, #tpu.memory_space<vmem>>, vector<32x32xf32>
      %cst_52 = arith.constant dense<0.000000e+00> : vector<16x32xf32>
      %115 = tpu.matmul %110, %114, %cst_52 {dimension_numbers = #tpu.dot_dimension_numbers<[1], [0], [0], [1], [0, 0, 1, 1], [], []>} : vector<16x32xf32>, vector<32x32xf32>, vector<16x32xf32> -> vector<16x32xf32>
      %c0_53 = arith.constant 0 : index
      %c0_54 = arith.constant 0 : index
      %116 = vector.load %arg18[%c0_53, %c0_54] : memref<16x32xf32, #tpu.memory_space<vmem>>, vector<16x32xf32>
      tpu.vector_store %arg18[%c0_53, %c0_54], %115 {strides = array<i32>} : memref<16x32xf32, #tpu.memory_space<vmem>>, vector<16x32xf32>,
    } else {
    }
    %c8_i32 = arith.constant 8 : i32
    %3 = arith.muli %arg1, %c8_i32 : i32
    %c0_i32_1 = arith.constant 0 : i32
    %4 = arith.addi %3, %c0_i32_1 : i32
    %5 = arith.index_cast %4 : i32 to index
    %6 = memref.load %arg2[%5] : memref<32xf32, #tpu.memory_space<smem>>
    %c1_i32 = arith.constant 1 : i32
    %7 = arith.addi %3, %c1_i32 : i32
    %8 = arith.index_cast %7 : i32 to index
    %9 = memref.load %arg2[%8] : memref<32xf32, #tpu.memory_space<smem>>
    %c2_i32 = arith.constant 2 : i32
    %10 = arith.addi %3, %c2_i32 : i32
    %11 = arith.index_cast %10 : i32 to index
    %12 = memref.load %arg2[%11] : memref<32xf32, #tpu.memory_space<smem>>
    %c3_i32 = arith.constant 3 : i32
    %13 = arith.addi %3, %c3_i32 : i32
    %14 = arith.index_cast %13 : i32 to index
    %15 = memref.load %arg2[%14] : memref<32xf32, #tpu.memory_space<smem>>
    %c0 = arith.constant 0 : index
    %c0_2 = arith.constant 0 : index
    %16 = vector.load %arg16[%c0, %c0_2] : memref<64x4xf32, #tpu.memory_space<vmem>>, vector<64x4xf32>
    %17 = vector.extract_strided_slice %16 {offsets = [0, 0], sizes = [64, 1], strides = [1, 1]} : vector<64x4xf32> to vector<64x1xf32>
    %c0_3 = arith.constant 0 : index
    %c0_4 = arith.constant 0 : index
    %18 = vector.load %arg8[%c0_3, %c0_4] : memref<4x32xf32, #tpu.memory_space<vmem>>, vector<1x32xf32>
    %19 = vector.broadcast %17 : vector<64x1xf32> to vector<64x32xf32>
    %20 = vector.broadcast %18 : vector<1x32xf32> to vector<64x32xf32>
    %21 = arith.mulf %19, %20 : vector<64x32xf32>
    %22 = vector.extract_strided_slice %16 {offsets = [0, 1], sizes = [64, 1], strides = [1, 1]} : vector<64x4xf32> to vector<64x1xf32>
    %c1 = arith.constant 1 : index
    %c0_5 = arith.constant 0 : index
    %23 = vector.load %arg8[%c1, %c0_5] : memref<4x32xf32, #tpu.memory_space<vmem>>, vector<1x32xf32>
    %24 = vector.broadcast %22 : vector<64x1xf32> to vector<64x32xf32>
    %25 = vector.broadcast %23 : vector<1x32xf32> to vector<64x32xf32>
    %26 = arith.mulf %24, %25 : vector<64x32xf32>
    %27 = arith.addf %21, %26 : vector<64x32xf32>
    %28 = vector.extract_strided_slice %16 {offsets = [0, 2], sizes = [64, 1], strides = [1, 1]} : vector<64x4xf32> to vector<64x1xf32>
    %c2 = arith.constant 2 : index
    %c0_6 = arith.constant 0 : index
    %29 = vector.load %arg8[%c2, %c0_6] : memref<4x32xf32, #tpu.memory_space<vmem>>, vector<1x32xf32>
    %30 = vector.broadcast %28 : vector<64x1xf32> to vector<64x32xf32>
    %31 = vector.broadcast %29 : vector<1x32xf32> to vector<64x32xf32>
    %32 = arith.mulf %30, %31 : vector<64x32xf32>
    %33 = arith.addf %27, %32 : vector<64x32xf32>
    %34 = vector.extract_strided_slice %16 {offsets = [0, 3], sizes = [64, 1], strides = [1, 1]} : vector<64x4xf32> to vector<64x1xf32>
    %c3 = arith.constant 3 : index
    %c0_7 = arith.constant 0 : index
    %35 = vector.load %arg8[%c3, %c0_7] : memref<4x32xf32, #tpu.memory_space<vmem>>, vector<1x32xf32>
    %36 = vector.broadcast %34 : vector<64x1xf32> to vector<64x32xf32>
    %37 = vector.broadcast %35 : vector<1x32xf32> to vector<64x32xf32>
    %38 = arith.mulf %36, %37 : vector<64x32xf32>
    %39 = arith.addf %33, %38 : vector<64x32xf32>
    %c0_8 = arith.constant 0 : index
    %c0_9 = arith.constant 0 : index
    %40 = vector.load %arg17[%c0_8, %c0_9] : memref<16x32xf32, #tpu.memory_space<vmem>>, vector<16x32xf32>
    %cst = arith.constant dense<0.000000e+00> : vector<64x16xf32>
    %41 = tpu.matmul %39, %40, %cst {dimension_numbers = #tpu.dot_dimension_numbers<[1], [1], [0], [0], [0, 0, 1, 0], [], []>} : vector<64x32xf32>, vector<16x32xf32>, vector<64x16xf32> -> vector<64x16xf32>
    %cst_10 = arith.constant 0.176776692 : f32
    %42 = vector.broadcast %cst_10 : f32 to vector<64x16xf32>
    %43 = arith.mulf %41, %42 : vector<64x16xf32>
    %44 = tpu.iota {dimensions = array<i32: 1>} : vector<64x16xi32>
    %c8_i32_11 = arith.constant 8 : i32
    %45 = vector.broadcast %c8_i32_11 : i32 to vector<64x16xi32>
    %46 = arith.cmpi slt, %44, %45 : vector<64x16xi32>
    %cst_12 = arith.constant -1.000000e+30 : f32
    %47 = vector.broadcast %cst_12 : f32 to vector<64x16xf32>
    %48 = arith.select %46, %43, %47 : vector<64x16xi1>, vector<64x16xf32>
    %cst_13 = arith.constant dense<0xFF800000> : vector<64xf32>
    %49 = vector.multi_reduction <maximumf>, %48, %cst_13 [1] : vector<64x16xf32> to vector<64xf32>
    %50 = vector.shape_cast %49 : vector<64xf32> to vector<64x1xf32>
    %cst_14 = arith.constant -1.000000e+30 : f32
    %51 = vector.broadcast %cst_14 : f32 to vector<64x16xf32>
    %52 = arith.select %46, %51, %43 : vector<64x16xi1>, vector<64x16xf32>
    %cst_15 = arith.constant dense<0xFF800000> : vector<64xf32>
    %53 = vector.multi_reduction <maximumf>, %52, %cst_15 [1] : vector<64x16xf32> to vector<64xf32>
    %54 = vector.shape_cast %53 : vector<64xf32> to vector<64x1xf32>
    %55 = vector.shape_cast %50 : vector<64x1xf32> to vector<64x1xf32>
    %56 = vector.broadcast %55 : vector<64x1xf32> to vector<64x16xf32>
    %57 = vector.shape_cast %54 : vector<64x1xf32> to vector<64x1xf32>
    %58 = vector.broadcast %57 : vector<64x1xf32> to vector<64x16xf32>
    %59 = arith.select %46, %56, %58 : vector<64x16xi1>, vector<64x16xf32>
    %60 = arith.subf %43, %59 : vector<64x16xf32>
    %61 = math.exp %60 : vector<64x16xf32>
    %cst_16 = arith.constant 0.000000e+00 : f32
    %62 = vector.broadcast %cst_16 : f32 to vector<64x16xf32>
    %63 = arith.select %46, %61, %62 : vector<64x16xi1>, vector<64x16xf32>
    %cst_17 = arith.constant dense<0.000000e+00> : vector<64xf32>
    %64 = vector.multi_reduction <add>, %63, %cst_17 [1] : vector<64x16xf32> to vector<64xf32>
    %65 = vector.shape_cast %64 : vector<64xf32> to vector<64x1xf32>
    %cst_18 = arith.constant 0.000000e+00 : f32
    %66 = vector.broadcast %cst_18 : f32 to vector<64x16xf32>
    %67 = arith.select %46, %66, %61 : vector<64x16xi1>, vector<64x16xf32>
    %cst_19 = arith.constant dense<0.000000e+00> : vector<64xf32>
    %68 = vector.multi_reduction <add>, %67, %cst_19 [1] : vector<64x16xf32> to vector<64xf32>
    %69 = vector.shape_cast %68 : vector<64xf32> to vector<64x1xf32>
    %70 = tpu.reciprocal %65 {approx = true} : vector<64x1xf32> -> vector<64x1xf32>
    %71 = vector.broadcast %15 : f32 to vector<64x1xf32>
    %72 = arith.mulf %71, %70 : vector<64x1xf32>
    %73 = tpu.reciprocal %69 {approx = true} : vector<64x1xf32> -> vector<64x1xf32>
    %74 = vector.broadcast %12 : f32 to vector<64x1xf32>
    %75 = arith.mulf %74, %73 : vector<64x1xf32>
    %76 = vector.shape_cast %72 : vector<64x1xf32> to vector<64x1xf32>
    %77 = vector.broadcast %76 : vector<64x1xf32> to vector<64x16xf32>
    %78 = vector.shape_cast %75 : vector<64x1xf32> to vector<64x1xf32>
    %79 = vector.broadcast %78 : vector<64x1xf32> to vector<64x16xf32>
    %80 = arith.select %46, %77, %79 : vector<64x16xi1>, vector<64x16xf32>
    %81 = arith.mulf %61, %80 : vector<64x16xf32>
    %c0_20 = arith.constant 0 : index
    %c0_21 = arith.constant 0 : index
    %82 = vector.load %arg18[%c0_20, %c0_21] : memref<16x32xf32, #tpu.memory_space<vmem>>, vector<16x32xf32>
    %cst_22 = arith.constant dense<0.000000e+00> : vector<64x32xf32>
    %83 = tpu.matmul %81, %82, %cst_22 {dimension_numbers = #tpu.dot_dimension_numbers<[1], [0], [0], [1], [0, 0, 1, 1], [], []>} : vector<64x16xf32>, vector<16x32xf32>, vector<64x32xf32> -> vector<64x32xf32>
    %c0_23 = arith.constant 0 : index
    %c0_24 = arith.constant 0 : index
    %84 = vector.load %arg11[%c0_23, %c0_24] : memref<32x4xf32, #tpu.memory_space<vmem>>, vector<32x4xf32>
    %cst_25 = arith.constant dense<0.000000e+00> : vector<64x4xf32>
    %85 = tpu.matmul %83, %84, %cst_25 {dimension_numbers = #tpu.dot_dimension_numbers<[1], [0], [0], [1], [0, 0, 1, 1], [], []>} : vector<64x32xf32>, vector<32x4xf32>, vector<64x4xf32> -> vector<64x4xf32>
    %86 = arith.index_cast %arg1 : i32 to index
    %c0_26 = arith.constant 0 : index
    %c0_27 = arith.constant 0 : index
    %87 = vector.load %arg5[%86, %c0_26, %c0_27] : memref<4x1x4xf32, #tpu.memory_space<vmem>>, vector<1x1x4xf32>
    %88 = vector.shape_cast %87 : vector<1x1x4xf32> to vector<1x4xf32>
    %89 = vector.broadcast %88 : vector<1x4xf32> to vector<64x4xf32>
    %90 = arith.addf %85, %89 : vector<64x4xf32>
    %91 = vector.broadcast %6 : f32 to vector<64x4xf32>
    %92 = arith.mulf %91, %16 : vector<64x4xf32>
    %93 = vector.broadcast %9 : f32 to vector<64x4xf32>
    %94 = arith.mulf %93, %90 : vector<64x4xf32>
    %95 = arith.addf %92, %94 : vector<64x4xf32>
    %c0_28 = arith.constant 0 : index
    %c0_29 = arith.constant 0 : index
    %96 = vector.load %arg16[%c0_28, %c0_29] : memref<64x4xf32, #tpu.memory_space<vmem>>, vector<64x4xf32>
    tpu.vector_store %arg16[%c0_28, %c0_29], %95 {strides = array<i32>} : memref<64x4xf32, #tpu.memory_space<vmem>>, vector<64x4xf32>,
    %c3_i32_30 = arith.constant 3 : i32
    %97 = arith.cmpi eq, %arg1, %c3_i32_30 : i32
    %98 = arith.extui %97 : i1 to i32
    %c0_i32_31 = arith.constant 0 : i32
    %99 = arith.cmpi ne, %98, %c0_i32_31 : i32
    scf.if %99 {
      %c0_32 = arith.constant 0 : index
      %c0_33 = arith.constant 0 : index
      %100 = vector.load %arg16[%c0_32, %c0_33] : memref<64x4xf32, #tpu.memory_space<vmem>>, vector<64x4xf32>
      %c0_34 = arith.constant 0 : index
      %c0_35 = arith.constant 0 : index
      %c0_36 = arith.constant 0 : index
      %101 = vector.load %arg14[%c0_34, %c0_35, %c0_36] : memref<1x64x4xf32, #tpu.memory_space<vmem>>, vector<1x64x4xf32>
      %102 = vector.shape_cast %101 : vector<1x64x4xf32> to vector<64x4xf32>
      %103 = vector.shape_cast %100 : vector<64x4xf32> to vector<1x64x4xf32>
      tpu.vector_store %arg14[%c0_34, %c0_35, %c0_36], %103 {strides = array<i32>} : memref<1x64x4xf32, #tpu.memory_space<vmem>>, vector<1x64x4xf32>,
      %c0_37 = arith.constant 0 : index
      %c0_38 = arith.constant 0 : index
      %104 = vector.load %arg16[%c0_37, %c0_38] : memref<64x4xf32, #tpu.memory_space<vmem>>, vector<64x4xf32>
      %cst_39 = arith.constant 5.4899807 : f32
      %105 = vector.broadcast %cst_39 : f32 to vector<64x4xf32>
      %106 = arith.mulf %104, %105 : vector<64x4xf32>
      %107 = vector.extract_strided_slice %106 {offsets = [0, 0], sizes = [64, 1], strides = [1, 1]} : vector<64x4xf32> to vector<64x1xf32>
      %c0_40 = arith.constant 0 : index
      %c0_41 = arith.constant 0 : index
      %108 = vector.load %arg12[%c0_40, %c0_41] : memref<4x3xf32, #tpu.memory_space<vmem>>, vector<1x3xf32>
      %109 = vector.broadcast %107 : vector<64x1xf32> to vector<64x3xf32>
      %110 = vector.broadcast %108 : vector<1x3xf32> to vector<64x3xf32>
      %111 = arith.mulf %109, %110 : vector<64x3xf32>
      %112 = vector.extract_strided_slice %106 {offsets = [0, 1], sizes = [64, 1], strides = [1, 1]} : vector<64x4xf32> to vector<64x1xf32>
      %c1_42 = arith.constant 1 : index
      %c0_43 = arith.constant 0 : index
      %113 = vector.load %arg12[%c1_42, %c0_43] : memref<4x3xf32, #tpu.memory_space<vmem>>, vector<1x3xf32>
      %114 = vector.broadcast %112 : vector<64x1xf32> to vector<64x3xf32>
      %115 = vector.broadcast %113 : vector<1x3xf32> to vector<64x3xf32>
      %116 = arith.mulf %114, %115 : vector<64x3xf32>
      %117 = arith.addf %111, %116 : vector<64x3xf32>
      %118 = vector.extract_strided_slice %106 {offsets = [0, 2], sizes = [64, 1], strides = [1, 1]} : vector<64x4xf32> to vector<64x1xf32>
      %c2_44 = arith.constant 2 : index
      %c0_45 = arith.constant 0 : index
      %119 = vector.load %arg12[%c2_44, %c0_45] : memref<4x3xf32, #tpu.memory_space<vmem>>, vector<1x3xf32>
      %120 = vector.broadcast %118 : vector<64x1xf32> to vector<64x3xf32>
      %121 = vector.broadcast %119 : vector<1x3xf32> to vector<64x3xf32>
      %122 = arith.mulf %120, %121 : vector<64x3xf32>
      %123 = arith.addf %117, %122 : vector<64x3xf32>
      %124 = vector.extract_strided_slice %106 {offsets = [0, 3], sizes = [64, 1], strides = [1, 1]} : vector<64x4xf32> to vector<64x1xf32>
      %c3_46 = arith.constant 3 : index
      %c0_47 = arith.constant 0 : index
      %125 = vector.load %arg12[%c3_46, %c0_47] : memref<4x3xf32, #tpu.memory_space<vmem>>, vector<1x3xf32>
      %126 = vector.broadcast %124 : vector<64x1xf32> to vector<64x3xf32>
      %127 = vector.broadcast %125 : vector<1x3xf32> to vector<64x3xf32>
      %128 = arith.mulf %126, %127 : vector<64x3xf32>
      %129 = arith.addf %123, %128 : vector<64x3xf32>
      %c0_48 = arith.constant 0 : index
      %c0_49 = arith.constant 0 : index
      %130 = vector.load %arg13[%c0_48, %c0_49] : memref<1x3xf32, #tpu.memory_space<vmem>>, vector<1x3xf32>
      %131 = vector.broadcast %130 : vector<1x3xf32> to vector<64x3xf32>
      %132 = arith.addf %129, %131 : vector<64x3xf32>
      %cst_50 = arith.constant 5.000000e-01 : f32
      %133 = vector.broadcast %cst_50 : f32 to vector<64x3xf32>
      %134 = arith.mulf %132, %133 : vector<64x3xf32>
      %cst_51 = arith.constant 5.000000e-01 : f32
      %135 = vector.broadcast %cst_51 : f32 to vector<64x3xf32>
      %136 = arith.addf %134, %135 : vector<64x3xf32>
      %cst_52 = arith.constant 0.000000e+00 : f32
      %cst_53 = arith.constant 1.000000e+00 : f32
      %137 = vector.broadcast %cst_52 : f32 to vector<64x3xf32>
      %138 = arith.maximumf %137, %136 : vector<64x3xf32>
      %139 = vector.broadcast %cst_53 : f32 to vector<64x3xf32>
      %140 = arith.minimumf %139, %138 : vector<64x3xf32>
      %c0_54 = arith.constant 0 : index
      %c0_55 = arith.constant 0 : index
      %c0_56 = arith.constant 0 : index
      %141 = vector.load %arg15[%c0_54, %c0_55, %c0_56] : memref<1x64x3xf32, #tpu.memory_space<vmem>>, vector<1x64x3xf32>
      %142 = vector.shape_cast %141 : vector<1x64x3xf32> to vector<64x3xf32>
      %143 = vector.shape_cast %140 : vector<64x3xf32> to vector<1x64x3xf32>
      tpu.vector_store %arg15[%c0_54, %c0_55, %c0_56], %143 {strides = array<i32>} : memref<1x64x3xf32, #tpu.memory_space<vmem>>, vector<1x64x3xf32>,
    } else {
    }
    return
  }
  func.func @transform_0(%arg0: i32, %arg1: i32, %arg2: memref<32xf32, #tpu.memory_space<smem>>) -> (i32, i32, i32) {
    %c0_i32 = arith.constant 0 : i32
    %c0_i32_0 = arith.constant 0 : i32
    %c0_i32_1 = arith.constant 0 : i32
    return %arg0, %c0_i32, %c0_i32_0 : i32, i32, i32
  }
  func.func @transform_1(%arg0: i32, %arg1: i32, %arg2: memref<32xf32, #tpu.memory_space<smem>>) -> (i32, i32, i32) {
    %c0_i32 = arith.constant 0 : i32
    %c0_i32_0 = arith.constant 0 : i32
    %c0_i32_1 = arith.constant 0 : i32
    return %arg0, %c0_i32, %c0_i32_0 : i32, i32, i32
  }
  func.func @transform_2(%arg0: i32, %arg1: i32, %arg2: memref<32xf32, #tpu.memory_space<smem>>) -> (i32, i32, i32) {
    %c0_i32 = arith.constant 0 : i32
    %c0_i32_0 = arith.constant 0 : i32
    %c0_i32_1 = arith.constant 0 : i32
    %c0_i32_2 = arith.constant 0 : i32
    return %c0_i32, %c0_i32_0, %c0_i32_1 : i32, i32, i32
  }
  func.func @transform_3(%arg0: i32, %arg1: i32, %arg2: memref<32xf32, #tpu.memory_space<smem>>) -> (i32, i32) {
    %c0_i32 = arith.constant 0 : i32
    %c0_i32_0 = arith.constant 0 : i32
    %c0_i32_1 = arith.constant 0 : i32
    return %c0_i32, %c0_i32_0 : i32, i32
  }
  func.func @transform_4(%arg0: i32, %arg1: i32, %arg2: memref<32xf32, #tpu.memory_space<smem>>) -> (i32, i32) {
    %c0_i32 = arith.constant 0 : i32
    %c0_i32_0 = arith.constant 0 : i32
    %c0_i32_1 = arith.constant 0 : i32
    return %c0_i32, %c0_i32_0 : i32, i32
  }
  func.func @transform_5(%arg0: i32, %arg1: i32, %arg2: memref<32xf32, #tpu.memory_space<smem>>) -> (i32, i32) {
    %c0_i32 = arith.constant 0 : i32
    %c0_i32_0 = arith.constant 0 : i32
    %c0_i32_1 = arith.constant 0 : i32
    return %c0_i32, %c0_i32_0 : i32, i32
  }
  func.func @transform_6(%arg0: i32, %arg1: i32, %arg2: memref<32xf32, #tpu.memory_space<smem>>) -> (i32, i32) {
    %c0_i32 = arith.constant 0 : i32
    %c0_i32_0 = arith.constant 0 : i32
    %c0_i32_1 = arith.constant 0 : i32
    return %c0_i32, %c0_i32_0 : i32, i32
  }
  func.func @transform_7(%arg0: i32, %arg1: i32, %arg2: memref<32xf32, #tpu.memory_space<smem>>) -> (i32, i32) {
    %c0_i32 = arith.constant 0 : i32
    %c0_i32_0 = arith.constant 0 : i32
    %c0_i32_1 = arith.constant 0 : i32
    return %c0_i32, %c0_i32_0 : i32, i32
  }
  func.func @transform_8(%arg0: i32, %arg1: i32, %arg2: memref<32xf32, #tpu.memory_space<smem>>) -> (i32, i32) {
    %c0_i32 = arith.constant 0 : i32
    %c0_i32_0 = arith.constant 0 : i32
    %c0_i32_1 = arith.constant 0 : i32
    return %c0_i32, %c0_i32_0 : i32, i32
  }
  func.func @transform_9(%arg0: i32, %arg1: i32, %arg2: memref<32xf32, #tpu.memory_space<smem>>) -> (i32, i32) {
    %c0_i32 = arith.constant 0 : i32
    %c0_i32_0 = arith.constant 0 : i32
    %c0_i32_1 = arith.constant 0 : i32
    return %c0_i32, %c0_i32_0 : i32, i32
  }
  func.func @transform_10(%arg0: i32, %arg1: i32, %arg2: memref<32xf32, #tpu.memory_space<smem>>) -> (i32, i32) {
    %c0_i32 = arith.constant 0 : i32
    %c0_i32_0 = arith.constant 0 : i32
    %c0_i32_1 = arith.constant 0 : i32
    return %c0_i32, %c0_i32_0 : i32, i32
  }
  func.func @transform_11(%arg0: i32, %arg1: i32, %arg2: memref<32xf32, #tpu.memory_space<smem>>) -> (i32, i32, i32) {
    %c0_i32 = arith.constant 0 : i32
    %c0_i32_0 = arith.constant 0 : i32
    %c0_i32_1 = arith.constant 0 : i32
    return %arg0, %c0_i32, %c0_i32_0 : i32, i32, i32
  }
  func.func @transform_12(%arg0: i32, %arg1: i32, %arg2: memref<32xf32, #tpu.memory_space<smem>>) -> (i32, i32, i32) {
    %c0_i32 = arith.constant 0 : i32
    %c0_i32_0 = arith.constant 0 : i32
    %c0_i32_1 = arith.constant 0 : i32
    return %arg0, %c0_i32, %c0_i32_0 : i32, i32, i32
  }
}

</mosaic_0001>

<llo_original>
// kernel: _pipeline.1
$region0: #{_pipeline.1}
  #allocation0 [shape = 'u32[]', space=smem, size = 0x4, offset = 0x4, fixed_abs, tag = 'smem constant byte address 0x4 - core index']
  #allocation1 [shape = 'u32[72,128]{1,0:T(1,128)}', space=vmem, size = 0x9000, scoped, tag = 'internal scratch']
  #allocation2 [shape = 'f32[64,4]{1,0:T(8,128)}', space=vmem, size = 0x8000, scoped, tag = 'scratch operand']
  #allocation3 [shape = 'f32[16,32]{1,0:T(8,128)}', space=vmem, size = 0x2000, scoped, tag = 'scratch operand']
  #allocation4 [shape = 'f32[16,32]{1,0:T(8,128)}', space=vmem, size = 0x2000, scoped, tag = 'scratch operand']
  #allocation5 [shape = 's32[1]{0}', space=sflag, size = 0x4, scoped, tag = 'scoped memory for _pipeline.1']
  #allocation6 [shape = 'u8[512]{0}', space=smem, size = 0x200, scoped, tag = 'prefetched SMEM operand 0']
  %s0 = inlined_call_operand.vmem [shape: f32[32], index: 0, kind: input, shape index: {}]
  %s1 = inlined_call_operand.vmem [shape: f32[2,64,4], index: 1, kind: input, shape index: {}]
  %s2 = inlined_call_operand.vmem [shape: f32[2,16,32], index: 2, kind: input, shape index: {}]
  %s3 = inlined_call_operand.vmem [shape: f32[4,1,4], index: 3, kind: input, shape index: {}]
  %s4 = inlined_call_operand.vmem [shape: f32[32,32], index: 4, kind: input, shape index: {}]
  %s5 = inlined_call_operand.vmem [shape: f32[1,32], index: 5, kind: input, shape index: {}]
  %s6 = inlined_call_operand.vmem [shape: f32[4,32], index: 6, kind: input, shape index: {}]
  %s7 = inlined_call_operand.vmem [shape: f32[32,32], index: 7, kind: input, shape index: {}]
  %s8 = inlined_call_operand.vmem [shape: f32[32,32], index: 8, kind: input, shape index: {}]
  %s9 = inlined_call_operand.vmem [shape: f32[32,4], index: 9, kind: input, shape index: {}]
  %s10 = inlined_call_operand.vmem [shape: f32[4,3], index: 10, kind: input, shape index: {}]
  %s11 = inlined_call_operand.vmem [shape: f32[1,3], index: 11, kind: input, shape index: {}]
  %s12 = inlined_call_operand.vmem [shape: f32[2,64,4], index: 12, kind: output, shape index: {0}]
  %s13 = inlined_call_operand.vmem [shape: f32[2,64,3], index: 13, kind: output, shape index: {1}]
  %14 = xla_tuple %s12, %s13
  %s15 = sld [smem:[#allocation0]]
  $region93: #{_pipeline.1} parent=0
    _
  %s17 = ssub.s32 1, %s15
  %s18 = scalar_select 0, %s17, %s15
  %s20 = sshll.u32 %s0, 4
  %s21 = int_to_ptr.vmem [resolvable:$true] %s20
  %23 = dma.vmem_to_smem %s21, 16, [#allocation6], [#allocation5]
  %25 = dma.done [#allocation5], 16
  %26 = sfence
  loop: start=0, step=1, limit=10
  $region2: #{_pipeline.1} parent=0 // loop_pre_header
    _
  $region3: #{_pipeline.1} parent=0 // loop_header
    %s28 = sphi 0, %s32
    %p29 = scmp.ge.s32.totalorder %s28, 10
    %s35 = sphi 0, %s47
    %s36 = sphi 0, %s43
    %s37 = sphi 0, %s35
    %s38 = sphi 0, %s36
    %s39 = sphi 0, %s37
    %s40 = sphi 0, %s38
    %s50 = sphi 0, %s52
    %s53 = sphi 0, %s50
    %s54 = sphi 0, %s53
    %s70 = sphi 0, %s54
    %s76 = sphi 0, %s78
    %s79 = sphi 0, %s76
    %s80 = sphi 0, %s79
    %s96 = sphi 0, %s80
    %s100 = sphi 0, %s100
    %s102 = sphi 0, %s100
    %s103 = sphi 0, %s102
    %s117 = sphi 0, %s103
    %s121 = sphi 0, %s121
    %s123 = sphi 0, %s121
    %s124 = sphi 0, %s123
    %s138 = sphi 0, %s124
    %s142 = sphi 0, %s142
    %s144 = sphi 0, %s142
    %s145 = sphi 0, %s144
    %s159 = sphi 0, %s145
    %s163 = sphi 0, %s163
    %s165 = sphi 0, %s163
    %s166 = sphi 0, %s165
    %s180 = sphi 0, %s166
    %s184 = sphi 0, %s184
    %s186 = sphi 0, %s184
    %s187 = sphi 0, %s186
    %s201 = sphi 0, %s187
    %s205 = sphi 0, %s205
    %s207 = sphi 0, %s205
    %s208 = sphi 0, %s207
    %s222 = sphi 0, %s208
    %s226 = sphi 0, %s226
    %s228 = sphi 0, %s226
    %s229 = sphi 0, %s228
    %s243 = sphi 0, %s229
    %s247 = sphi 0, %s247
    %s249 = sphi 0, %s247
    %s250 = sphi 0, %s249
    %s264 = sphi 0, %s250
    %s268 = sphi 0, %s268
    %s270 = sphi 0, %s268
    %s271 = sphi 0, %s270
    %s285 = sphi 0, %s271
    %s291 = sphi 0, %s293
    %s294 = sphi 0, %s291
    %s295 = sphi 0, %s294
    %s311 = sphi 0, %s295
    %s317 = sphi 0, %s319
    %s320 = sphi 0, %s317
    %s321 = sphi 0, %s320
    %s337 = sphi 0, %s321
  $region4: #{_pipeline.1} parent=0 // loop_header_branch
    %31 = sbr.rel (%p29) target = $region8
  $region5: #{_pipeline.1} parent=0 // loop_body
    %s33 = ssub.s32 %s28, 1
    %s34 = ssub.s32 %s28, 2
    %s41 = sadd.s32 1, %s36
    %p42 = scmp.ge.s32.totalorder %s41, 4
    %s43 = scalar_select %p42, 0, %s41
    %s44 = sadd.s32 1, %s35
    %s45 = scalar_select %p42, %s44, %s35
    %p46 = scmp.ge.s32.totalorder %s45, 2
    %s47 = scalar_select %p46, 0, %s45
    %s48 = ssub.s32 %s35, %s47
    %p49 = scmp.eq.s32.totalorder %s48, 0
    %s51 = sadd.s32 %s50, 1
    %s52 = scalar_select %p49, %s50, %s51
    %p55 = pneg %p49
    %p56 = scmp.eq.s32.totalorder %s28, 7
    %p57 = por %p55, %p56
    %p58 = scmp.ne.s32.totalorder %s50, %s53
    %p59 = scmp.eq.s32.totalorder %s28, 0
    %p60 = por %p58, %p59
    %p61 = scmp.ne.s32.totalorder %s50, %s53
    %p62 = scmp.eq.s32.totalorder %s33, 7
    %p63 = por %p61, %p62
    %p64 = scmp.ne.s32.totalorder %s53, %s54
    %p65 = scmp.eq.s32.totalorder %s33, 0
    %p66 = por %p64, %p65
    %p67 = scmp.ne.s32.totalorder %s53, %s54
    %p68 = scmp.eq.s32.totalorder %s34, 7
    %p69 = por %p67, %p68
    %p71 = scmp.ne.s32.totalorder %s54, %s70
    %p72 = scmp.eq.s32.totalorder %s34, 0
    %p73 = por %p71, %p72
    %s74 = ssub.s32 %s35, %s47
    %p75 = scmp.eq.s32.totalorder %s74, 0
    %s77 = sadd.s32 %s76, 1
    %s78 = scalar_select %p75, %s76, %s77
    %p81 = pneg %p75
    %p82 = scmp.eq.s32.totalorder %s28, 7
    %p83 = por %p81, %p82
    %p84 = scmp.ne.s32.totalorder %s76, %s79
    %p85 = scmp.eq.s32.totalorder %s28, 0
    %p86 = por %p84, %p85
    %p87 = scmp.ne.s32.totalorder %s76, %s79
    %p88 = scmp.eq.s32.totalorder %s33, 7
    %p89 = por %p87, %p88
    %p90 = scmp.ne.s32.totalorder %s79, %s80
    %p91 = scmp.eq.s32.totalorder %s33, 0
    %p92 = por %p90, %p91
    %p93 = scmp.ne.s32.totalorder %s79, %s80
    %p94 = scmp.eq.s32.totalorder %s34, 7
    %p95 = por %p93, %p94
    %p97 = scmp.ne.s32.totalorder %s80, %s96
    %p98 = scmp.eq.s32.totalorder %s34, 0
    %p99 = por %p97, %p98
    %s101 = sadd.s32 %s100, 1
    %p104 = scmp.eq.s32.totalorder %s28, 7
    %p105 = scmp.ne.s32.totalorder %s100, %s102
    %p106 = scmp.eq.s32.totalorder %s28, 0
    %p107 = por %p105, %p106
    %p108 = scmp.ne.s32.totalorder %s100, %s102
    %p109 = scmp.eq.s32.totalorder %s33, 7
    %p110 = por %p108, %p109
    %p111 = scmp.ne.s32.totalorder %s102, %s103
    %p112 = scmp.eq.s32.totalorder %s33, 0
    %p113 = por %p111, %p112
    %p114 = scmp.ne.s32.totalorder %s102, %s103
    %p115 = scmp.eq.s32.totalorder %s34, 7
    %p116 = por %p114, %p115
    %p118 = scmp.ne.s32.totalorder %s103, %s117
    %p119 = scmp.eq.s32.totalorder %s34, 0
    %p120 = por %p118, %p119
    %s122 = sadd.s32 %s121, 1
    %p125 = scmp.eq.s32.totalorder %s28, 7
    %p126 = scmp.ne.s32.totalorder %s121, %s123
    %p127 = scmp.eq.s32.totalorder %s28, 0
    %p128 = por %p126, %p127
    %p129 = scmp.ne.s32.totalorder %s121, %s123
    %p130 = scmp.eq.s32.totalorder %s33, 7
    %p131 = por %p129, %p130
    %p132 = scmp.ne.s32.totalorder %s123, %s124
    %p133 = scmp.eq.s32.totalorder %s33, 0
    %p134 = por %p132, %p133
    %p135 = scmp.ne.s32.totalorder %s123, %s124
    %p136 = scmp.eq.s32.totalorder %s34, 7
    %p137 = por %p135, %p136
    %p139 = scmp.ne.s32.totalorder %s124, %s138
    %p140 = scmp.eq.s32.totalorder %s34, 0
    %p141 = por %p139, %p140
    %s143 = sadd.s32 %s142, 1
    %p146 = scmp.eq.s32.totalorder %s28, 7
    %p147 = scmp.ne.s32.totalorder %s142, %s144
    %p148 = scmp.eq.s32.totalorder %s28, 0
    %p149 = por %p147, %p148
    %p150 = scmp.ne.s32.totalorder %s142, %s144
    %p151 = scmp.eq.s32.totalorder %s33, 7
    %p152 = por %p150, %p151
    %p153 = scmp.ne.s32.totalorder %s144, %s145
    %p154 = scmp.eq.s32.totalorder %s33, 0
    %p155 = por %p153, %p154
    %p156 = scmp.ne.s32.totalorder %s144, %s145
    %p157 = scmp.eq.s32.totalorder %s34, 7
    %p158 = por %p156, %p157
    %p160 = scmp.ne.s32.totalorder %s145, %s159
    %p161 = scmp.eq.s32.totalorder %s34, 0
    %p162 = por %p160, %p161
    %s164 = sadd.s32 %s163, 1
    %p167 = scmp.eq.s32.totalorder %s28, 7
    %p168 = scmp.ne.s32.totalorder %s163, %s165
    %p169 = scmp.eq.s32.totalorder %s28, 0
    %p170 = por %p168, %p169
    %p171 = scmp.ne.s32.totalorder %s163, %s165
    %p172 = scmp.eq.s32.totalorder %s33, 7
    %p173 = por %p171, %p172
    %p174 = scmp.ne.s32.totalorder %s165, %s166
    %p175 = scmp.eq.s32.totalorder %s33, 0
    %p176 = por %p174, %p175
    %p177 = scmp.ne.s32.totalorder %s165, %s166
    %p178 = scmp.eq.s32.totalorder %s34, 7
    %p179 = por %p177, %p178
    %p181 = scmp.ne.s32.totalorder %s166, %s180
    %p182 = scmp.eq.s32.totalorder %s34, 0
    %p183 = por %p181, %p182
    %s185 = sadd.s32 %s184, 1
    %p188 = scmp.eq.s32.totalorder %s28, 7
    %p189 = scmp.ne.s32.totalorder %s184, %s186
    %p190 = scmp.eq.s32.totalorder %s28, 0
    %p191 = por %p189, %p190
    %p192 = scmp.ne.s32.totalorder %s184, %s186
    %p193 = scmp.eq.s32.totalorder %s33, 7
    %p194 = por %p192, %p193
    %p195 = scmp.ne.s32.totalorder %s186, %s187
    %p196 = scmp.eq.s32.totalorder %s33, 0
    %p197 = por %p195, %p196
    %p198 = scmp.ne.s32.totalorder %s186, %s187
    %p199 = scmp.eq.s32.totalorder %s34, 7
    %p200 = por %p198, %p199
    %p202 = scmp.ne.s32.totalorder %s187, %s201
    %p203 = scmp.eq.s32.totalorder %s34, 0
    %p204 = por %p202, %p203
    %s206 = sadd.s32 %s205, 1
    %p209 = scmp.eq.s32.totalorder %s28, 7
    %p210 = scmp.ne.s32.totalorder %s205, %s207
    %p211 = scmp.eq.s32.totalorder %s28, 0
    %p212 = por %p210, %p211
    %p213 = scmp.ne.s32.totalorder %s205, %s207
    %p214 = scmp.eq.s32.totalorder %s33, 7
    %p215 = por %p213, %p214
    %p216 = scmp.ne.s32.totalorder %s207, %s208
    %p217 = scmp.eq.s32.totalorder %s33, 0
    %p218 = por %p216, %p217
    %p219 = scmp.ne.s32.totalorder %s207, %s208
    %p220 = scmp.eq.s32.totalorder %s34, 7
    %p221 = por %p219, %p220
    %p223 = scmp.ne.s32.totalorder %s208, %s222
    %p224 = scmp.eq.s32.totalorder %s34, 0
    %p225 = por %p223, %p224
    %s227 = sadd.s32 %s226, 1
    %p230 = scmp.eq.s32.totalorder %s28, 7
    %p231 = scmp.ne.s32.totalorder %s226, %s228
    %p232 = scmp.eq.s32.totalorder %s28, 0
    %p233 = por %p231, %p232
    %p234 = scmp.ne.s32.totalorder %s226, %s228
    %p235 = scmp.eq.s32.totalorder %s33, 7
    %p236 = por %p234, %p235
    %p237 = scmp.ne.s32.totalorder %s228, %s229
    %p238 = scmp.eq.s32.totalorder %s33, 0
    %p239 = por %p237, %p238
    %p240 = scmp.ne.s32.totalorder %s228, %s229
    %p241 = scmp.eq.s32.totalorder %s34, 7
    %p242 = por %p240, %p241
    %p244 = scmp.ne.s32.totalorder %s229, %s243
    %p245 = scmp.eq.s32.totalorder %s34, 0
    %p246 = por %p244, %p245
    %s248 = sadd.s32 %s247, 1
    %p251 = scmp.eq.s32.totalorder %s28, 7
    %p252 = scmp.ne.s32.totalorder %s247, %s249
    %p253 = scmp.eq.s32.totalorder %s28, 0
    %p254 = por %p252, %p253
    %p255 = scmp.ne.s32.totalorder %s247, %s249
    %p256 = scmp.eq.s32.totalorder %s33, 7
    %p257 = por %p255, %p256
    %p258 = scmp.ne.s32.totalorder %s249, %s250
    %p259 = scmp.eq.s32.totalorder %s33, 0
    %p260 = por %p258, %p259
    %p261 = scmp.ne.s32.totalorder %s249, %s250
    %p262 = scmp.eq.s32.totalorder %s34, 7
    %p263 = por %p261, %p262
    %p265 = scmp.ne.s32.totalorder %s250, %s264
    %p266 = scmp.eq.s32.totalorder %s34, 0
    %p267 = por %p265, %p266
    %s269 = sadd.s32 %s268, 1
    %p272 = scmp.eq.s32.totalorder %s28, 7
    %p273 = scmp.ne.s32.totalorder %s268, %s270
    %p274 = scmp.eq.s32.totalorder %s28, 0
    %p275 = por %p273, %p274
    %p276 = scmp.ne.s32.totalorder %s268, %s270
    %p277 = scmp.eq.s32.totalorder %s33, 7
    %p278 = por %p276, %p277
    %p279 = scmp.ne.s32.totalorder %s270, %s271
    %p280 = scmp.eq.s32.totalorder %s33, 0
    %p281 = por %p279, %p280
    %p282 = scmp.ne.s32.totalorder %s270, %s271
    %p283 = scmp.eq.s32.totalorder %s34, 7
    %p284 = por %p282, %p283
    %p286 = scmp.ne.s32.totalorder %s271, %s285
    %p287 = scmp.eq.s32.totalorder %s34, 0
    %p288 = por %p286, %p287
    %s289 = ssub.s32 %s35, %s47
    %p290 = scmp.eq.s32.totalorder %s289, 0
    %s292 = sadd.s32 %s291, 1
    %s293 = scalar_select %p290, %s291, %s292
    %p296 = pneg %p290
    %p297 = scmp.eq.s32.totalorder %s28, 7
    %p298 = por %p296, %p297
    %p299 = scmp.ne.s32.totalorder %s291, %s294
    %p300 = scmp.eq.s32.totalorder %s28, 0
    %p301 = por %p299, %p300
    %p302 = scmp.ne.s32.totalorder %s291, %s294
    %p303 = scmp.eq.s32.totalorder %s33, 7
    %p304 = por %p302, %p303
    %p305 = scmp.ne.s32.totalorder %s294, %s295
    %p306 = scmp.eq.s32.totalorder %s33, 0
    %p307 = por %p305, %p306
    %p308 = scmp.ne.s32.totalorder %s294, %s295
    %p309 = scmp.eq.s32.totalorder %s34, 7
    %p310 = por %p308, %p309
    %p312 = scmp.ne.s32.totalorder %s295, %s311
    %p313 = scmp.eq.s32.totalorder %s34, 0
    %p314 = por %p312, %p313
    %s315 = ssub.s32 %s35, %s47
    %p316 = scmp.eq.s32.totalorder %s315, 0
    %s318 = sadd.s32 %s317, 1
    %s319 = scalar_select %p316, %s317, %s318
    %p322 = pneg %p316
    %p323 = scmp.eq.s32.totalorder %s28, 7
    %p324 = por %p322, %p323
    %p325 = scmp.ne.s32.totalorder %s317, %s320
    %p326 = scmp.eq.s32.totalorder %s28, 0
    %p327 = por %p325, %p326
    %p328 = scmp.ne.s32.totalorder %s317, %s320
    %p329 = scmp.eq.s32.totalorder %s33, 7
    %p330 = por %p328, %p329
    %p331 = scmp.ne.s32.totalorder %s320, %s321
    %p332 = scmp.eq.s32.totalorder %s33, 0
    %p333 = por %p331, %p332
    %p334 = scmp.ne.s32.totalorder %s320, %s321
    %p335 = scmp.eq.s32.totalorder %s34, 7
    %p336 = por %p334, %p335
    %p338 = scmp.ne.s32.totalorder %s321, %s337
    %p339 = scmp.eq.s32.totalorder %s34, 0
    %p340 = por %p338, %p339
    %p341 = scmp.le.s32.totalorder 1, %s28
    %p342 = scmp.lt.s32.totalorder %s28, 9
    %p343 = pnand %p341, %p342
    %p344 = pneg %p343
    // Predicated region
    $region9: #{_pipeline.1} parent=5 // pred_check
      _
    $region10: #{_pipeline.1} parent=5 // pred_check_branch
      %346 = sbr.rel (%p343) target = $region12
    $region11: #{_pipeline.1} parent=5 // pred_region
      %s347 = ssub.s32 %s28, 1
      // Predicated region
      $region13: #{_pipeline.1} parent=11 // pred_check
        %p348 = pneg %p113
      $region14: #{_pipeline.1} parent=11 // pred_check_branch
        %350 = sbr.rel (%p348) target = $region16
      $region15: #{_pipeline.1} parent=11 // pred_region
        _
      $region16: #{_pipeline.1} parent=11 // pred_fallthru
        _
      // Predicated region
      $region17: #{_pipeline.1} parent=11 // pred_check
        %p351 = pneg %p134
      $region18: #{_pipeline.1} parent=11 // pred_check_branch
        %353 = sbr.rel (%p351) target = $region20
      $region19: #{_pipeline.1} parent=11 // pred_region
        _
      $region20: #{_pipeline.1} parent=11 // pred_fallthru
        _
      // Predicated region
      $region21: #{_pipeline.1} parent=11 // pred_check
        %p354 = pneg %p155
      $region22: #{_pipeline.1} parent=11 // pred_check_branch
        %356 = sbr.rel (%p354) target = $region24
      $region23: #{_pipeline.1} parent=11 // pred_region
        _
      $region24: #{_pipeline.1} parent=11 // pred_fallthru
        _
      // Predicated region
      $region25: #{_pipeline.1} parent=11 // pred_check
        %p357 = pneg %p176
      $region26: #{_pipeline.1} parent=11 // pred_check_branch
        %359 = sbr.rel (%p357) target = $region28
      $region27: #{_pipeline.1} parent=11 // pred_region
        _
      $region28: #{_pipeline.1} parent=11 // pred_fallthru
        _
      // Predicated region
      $region29: #{_pipeline.1} parent=11 // pred_check
        %p360 = pneg %p197
      $region30: #{_pipeline.1} parent=11 // pred_check_branch
        %362 = sbr.rel (%p360) target = $region32
      $region31: #{_pipeline.1} parent=11 // pred_region
        _
      $region32: #{_pipeline.1} parent=11 // pred_fallthru
        _
      // Predicated region
      $region33: #{_pipeline.1} parent=11 // pred_check
        %p363 = pneg %p218
      $region34: #{_pipeline.1} parent=11 // pred_check_branch
        %365 = sbr.rel (%p363) target = $region36
      $region35: #{_pipeline.1} parent=11 // pred_region
        _
      $region36: #{_pipeline.1} parent=11 // pred_fallthru
        _
      // Predicated region
      $region37: #{_pipeline.1} parent=11 // pred_check
        %p366 = pneg %p239
      $region38: #{_pipeline.1} parent=11 // pred_check_branch
        %368 = sbr.rel (%p366) target = $region40
      $region39: #{_pipeline.1} parent=11 // pred_region
        _
      $region40: #{_pipeline.1} parent=11 // pred_fallthru
        _
      // Predicated region
      $region41: #{_pipeline.1} parent=11 // pred_check
        %p369 = pneg %p260
      $region42: #{_pipeline.1} parent=11 // pred_check_branch
        %371 = sbr.rel (%p369) target = $region44
      $region43: #{_pipeline.1} parent=11 // pred_region
        _
      $region44: #{_pipeline.1} parent=11 // pred_fallthru
        _
      // Predicated region
      $region45: #{_pipeline.1} parent=11 // pred_check
        %p372 = pneg %p281
      $region46: #{_pipeline.1} parent=11 // pred_check_branch
        %374 = sbr.rel (%p372) target = $region48
      $region47: #{_pipeline.1} parent=11 // pred_region
        _
      $region48: #{_pipeline.1} parent=11 // pred_fallthru
        _
    $region12: #{_pipeline.1} parent=5 // pred_fallthru
      _
    %p375 = scmp.lt.s32.totalorder %s28, 8
    // Predicated region
    $region49: #{_pipeline.1} parent=5 // pred_check
      %p376 = pneg %p375
    $region50: #{_pipeline.1} parent=5 // pred_check_branch
      %378 = sbr.rel (%p376) target = $region52
    $region51: #{_pipeline.1} parent=5 // pred_region
      // Predicated region
      $region53: #{_pipeline.1} parent=51 // pred_check
        %p379 = pneg %p60
      $region54: #{_pipeline.1} parent=51 // pred_check_branch
        %381 = sbr.rel (%p379) target = $region56
      $region55: #{_pipeline.1} parent=51 // pred_region
        %p382 = scmp.lt.s32.totalorder %s35, 1
        %s383 = scalar_select %p382, %s35, 1
        %s384 = smul.addr %s383, 8
        %s385 = smul.addr %s384, 8
        %s386 = scalar_lea.vmem %s1, %s385
      $region56: #{_pipeline.1} parent=51 // pred_fallthru
        _
      // Predicated region
      $region57: #{_pipeline.1} parent=51 // pred_check
        %p387 = pneg %p86
      $region58: #{_pipeline.1} parent=51 // pred_check_branch
        %389 = sbr.rel (%p387) target = $region60
      $region59: #{_pipeline.1} parent=51 // pred_region
        %p390 = scmp.lt.s32.totalorder %s35, 1
        %s391 = scalar_select %p390, %s35, 1
        %s392 = smul.addr %s391, 2
        %s393 = smul.addr %s392, 8
        %s394 = scalar_lea.vmem %s2, %s393
      $region60: #{_pipeline.1} parent=51 // pred_fallthru
        _
    $region52: #{_pipeline.1} parent=5 // pred_fallthru
      _
    %p395 = scmp.le.s32.totalorder 1, %s28
    %p396 = scmp.lt.s32.totalorder %s28, 9
    %p397 = pnand %p395, %p396
    %p398 = pneg %p397
    // Predicated region
    $region61: #{_pipeline.1} parent=5 // pred_check
      _
    $region62: #{_pipeline.1} parent=5 // pred_check_branch
      %400 = sbr.rel (%p397) target = $region64
    $region63: #{_pipeline.1} parent=5 // pred_region
      %s401 = ssub.s32 %s28, 1
      %p402 = scmp.lt.s32.totalorder %s37, 1
      %s403 = scalar_select %p402, %s37, 1
      %s404 = smul.addr %s403, 8
      %s405 = smul.addr %s404, 8
      %s406 = scalar_lea.vmem %s1, %s405
      %p407 = pneg %p66
      %p408 = pneg %p63
      %p409 = scmp.lt.s32.totalorder %s37, 1
      %s410 = scalar_select %p409, %s37, 1
      %s411 = smul.addr %s410, 2
      %s412 = smul.addr %s411, 8
      %s413 = scalar_lea.vmem %s2, %s412
      %p414 = pneg %p92
      %p415 = pneg %p89
      %p416 = pneg %p113
      %p417 = pneg %p110
      %p418 = pneg %p134
      %p419 = pneg %p131
      %p420 = pneg %p155
      %p421 = pneg %p152
      %p422 = pneg %p176
      %p423 = pneg %p173
      %p424 = pneg %p197
      %p425 = pneg %p194
      %p426 = pneg %p218
      %p427 = pneg %p215
      %p428 = pneg %p239
      %p429 = pneg %p236
      %p430 = pneg %p260
      %p431 = pneg %p257
      %p432 = pneg %p281
      %p433 = pneg %p278
      %p434 = pneg %p307
      %p435 = pneg %p304
      %p436 = scmp.lt.s32.totalorder %s37, 1
      %s437 = scalar_select %p436, %s37, 1
      %s438 = smul.addr %s437, 8
      %s439 = smul.addr %s438, 8
      %s440 = scalar_lea.vmem %s12, %s439
      %p441 = pneg %p333
      %p442 = pneg %p330
      %p443 = scmp.lt.s32.totalorder %s37, 1
      %s444 = scalar_select %p443, %s37, 1
      %s445 = smul.addr %s444, 8
      %s446 = smul.addr %s445, 8
      %s447 = scalar_lea.vmem %s13, %s446
      %p448 = scmp.lt.s32.totalorder %s37, 1
      %s449 = scalar_select %p448, %s37, 1
      %s450 = smul.addr %s449, 8
      %s451 = smul.addr %s450, 8
      %s452 = scalar_lea.vmem %s1, %s451
      %p453 = scmp.lt.s32.totalorder %s37, 1
      %s454 = scalar_select %p453, %s37, 1
      %s455 = smul.addr %s454, 2
      %s456 = smul.addr %s455, 8
      %s457 = scalar_lea.vmem %s2, %s456
      %p458 = scmp.lt.s32.totalorder %s37, 1
      %s459 = scalar_select %p458, %s37, 1
      %s460 = smul.addr %s459, 8
      %s461 = smul.addr %s460, 8
      %s462 = scalar_lea.vmem %s12, %s461
      %p463 = scmp.lt.s32.totalorder %s37, 1
      %s464 = scalar_select %p463, %s37, 1
      %s465 = smul.addr %s464, 8
      %s466 = smul.addr %s465, 8
      %s467 = scalar_lea.vmem %s13, %s466
      %p468 = scmp.eq.s32.totalorder %s38, 0
      // Predicated region
      $region65: #{_pipeline.1} parent=63 // pred_check
        %p469 = pneg %p468
      $region66: #{_pipeline.1} parent=63 // pred_check_branch
        %471 = sbr.rel (%p469) target = $region68
      $region67: #{_pipeline.1} parent=63 // pred_region
        %v472 = vld [vmem:[%s452] sm:$0xff]
        %v473 = vld [vmem:[%s452 + $0x8] sm:$0xff]
        %v474 = vld [vmem:[%s452 + $0x10] sm:$0xff]
        %v475 = vld [vmem:[%s452 + $0x18] sm:$0xff]
        %v476 = vld [vmem:[%s452 + $0x20] sm:$0xff]
        %v477 = vld [vmem:[%s452 + $0x28] sm:$0xff]
        %v478 = vld [vmem:[%s452 + $0x30] sm:$0xff]
        %v479 = vld [vmem:[%s452 + $0x38] sm:$0xff]
        %vm480 = vcmask 31744
        %481 = vst.msk [vmem:[#allocation2] sm:$0xff] %vm480, %v472
        %482 = vst.msk [vmem:[#allocation2 + $0x8] sm:$0xff] %vm480, %v473
        %483 = vst.msk [vmem:[#allocation2 + $0x10] sm:$0xff] %vm480, %v474
        %484 = vst.msk [vmem:[#allocation2 + $0x18] sm:$0xff] %vm480, %v475
        %485 = vst.msk [vmem:[#allocation2 + $0x20] sm:$0xff] %vm480, %v476
        %486 = vst.msk [vmem:[#allocation2 + $0x28] sm:$0xff] %vm480, %v477
        %487 = vst.msk [vmem:[#allocation2 + $0x30] sm:$0xff] %vm480, %v478
        %488 = vst.msk [vmem:[#allocation2 + $0x38] sm:$0xff] %vm480, %v479
        %v489 = vld [vmem:[%s457] sm:$0xff]
        %v490 = vld [vmem:[%s457 + $0x8] sm:$0xff]
        %v491 = vld [vmem:[%s4] sm:$0xff]
        %v492 = vld [vmem:[%s4 + $0x8] sm:$0xff]
        %v493 = vld [vmem:[%s4 + $0x10] sm:$0xff]
        %v494 = vld [vmem:[%s4 + $0x18] sm:$0xff]
        %v495 = vld [vmem:[%s5] sm:$0x1]
        %v497 = vperm.slane %v495, 0
        %vm499 = vcmask 261120
        %v501 = vsel %vm499, %v489, 0
        %v504 = vsel %vm499, %v490, 0
        %506 = vmatpush.msra.mxu0 0.0
        %507 = vmatpush.msra.mxu0 0.0
        %508 = vmatpush.msra.mxu0 0.0
        %509 = vmatpush.msra.mxu0 0.0
        %510 = vmatpush.msra.mxu0 0.0
        %511 = vmatpush.msra.mxu0 0.0
        %512 = vmatpush.msra.mxu0 0.0
        %513 = vmatpush.msra.mxu0 0.0
        %514 = vmatpush.msra.mxu0 0.0
        %515 = vmatpush.msra.mxu0 0.0
        %516 = vmatpush.msra.mxu0 0.0
        %517 = vmatpush.msra.mxu0 0.0
        %518 = vmatpush.msra.mxu0 %v494
        %519 = vmatpush.msra.mxu0 %v493
        %520 = vmatpush.msra.mxu0 %v492
        %521 = vmatpush.msra.mxu0 %v491
        %522 = vmatmul.f32.gmra.mxu0 %v501
        %v523 = vpop.f32.mrf.mxu0
        %v524 = vadd.f32 %v497, %v523
        %525 = vmatmul.f32.gmra.mxu0 %v504
        %v526 = vpop.f32.mrf.mxu0
        %v527 = vadd.f32 %v497, %v526
        %528 = vdwg.mxu0
        %v529 = vtanh.pop %v524
        %v530 = vtanh.pop %v527
        %v531 = vld [vmem:[%s7] sm:$0xff]
        %v532 = vld [vmem:[%s7 + $0x8] sm:$0xff]
        %v533 = vld [vmem:[%s7 + $0x10] sm:$0xff]
        %v534 = vld [vmem:[%s7 + $0x18] sm:$0xff]
        %v536 = vsel %vm499, %v529, 0
        %v539 = vsel %vm499, %v530, 0
        %541 = vmatpush.msra.mxu0 0.0
        %542 = vmatpush.msra.mxu0 0.0
        %543 = vmatpush.msra.mxu0 0.0
        %544 = vmatpush.msra.mxu0 0.0
        %545 = vmatpush.msra.mxu0 0.0
        %546 = vmatpush.msra.mxu0 0.0
        %547 = vmatpush.msra.mxu0 0.0
        %548 = vmatpush.msra.mxu0 0.0
        %549 = vmatpush.msra.mxu0 0.0
        %550 = vmatpush.msra.mxu0 0.0
        %551 = vmatpush.msra.mxu0 0.0
        %552 = vmatpush.msra.mxu0 0.0
        %553 = vmatpush.msra.mxu0 %v534
        %554 = vmatpush.msra.mxu0 %v533
        %555 = vmatpush.msra.mxu0 %v532
        %556 = vmatpush.msra.mxu0 %v531
        %557 = vmatmul.f32.gmra.mxu0 %v536
        %v558 = vpop.f32.mrf.mxu0
        %v559 = vadd.f32 0.0, %v558
        %560 = vmatmul.f32.gmra.mxu0 %v539
        %v561 = vpop.f32.mrf.mxu0
        %v562 = vadd.f32 0.0, %v561
        %563 = vdwg.mxu0
        %564 = vst.msk [vmem:[#allocation3] sm:$0xff] %vm499, %v559
        %565 = vst.msk [vmem:[#allocation3 + $0x8] sm:$0xff] %vm499, %v562
        %v566 = vld [vmem:[%s8] sm:$0xff]
        %v567 = vld [vmem:[%s8 + $0x8] sm:$0xff]
        %v568 = vld [vmem:[%s8 + $0x10] sm:$0xff]
        %v569 = vld [vmem:[%s8 + $0x18] sm:$0xff]
        %570 = vmatpush.msra.mxu0 0.0
        %571 = vmatpush.msra.mxu0 0.0
        %572 = vmatpush.msra.mxu0 0.0
        %573 = vmatpush.msra.mxu0 0.0
        %574 = vmatpush.msra.mxu0 0.0
        %575 = vmatpush.msra.mxu0 0.0
        %576 = vmatpush.msra.mxu0 0.0
        %577 = vmatpush.msra.mxu0 0.0
        %578 = vmatpush.msra.mxu0 0.0
        %579 = vmatpush.msra.mxu0 0.0
        %580 = vmatpush.msra.mxu0 0.0
        %581 = vmatpush.msra.mxu0 0.0
        %582 = vmatpush.msra.mxu0 %v569
        %583 = vmatpush.msra.mxu0 %v568
        %584 = vmatpush.msra.mxu0 %v567
        %585 = vmatpush.msra.mxu0 %v566
        %586 = vmatmul.f32.gmra.mxu0 %v536
        %v587 = vpop.f32.mrf.mxu0
        %v588 = vadd.f32 0.0, %v587
        %589 = vmatmul.f32.gmra.mxu0 %v539
        %v590 = vpop.f32.mrf.mxu0
        %v591 = vadd.f32 0.0, %v590
        %592 = vdwg.mxu0
        %593 = vst.msk [vmem:[#allocation4] sm:$0xff] %vm499, %v588
        %594 = vst.msk [vmem:[#allocation4 + $0x8] sm:$0xff] %vm499, %v591
      $region68: #{_pipeline.1} parent=63 // pred_fallthru
        _
      %s595 = smul.u32 %s38, 8
      %s596 = sld [smem:[#allocation6 + %s595]]
      %s597 = sadd.s32 %s595, 1
      %s598 = sld [smem:[#allocation6 + %s597]]
      %s599 = sadd.s32 %s595, 2
      %s600 = sld [smem:[#allocation6 + %s599]]
      %s601 = sadd.s32 %s595, 3
      %s602 = sld [smem:[#allocation6 + %s601]]
      %v603 = vld [vmem:[#allocation2] sm:$0xff]
      %v604 = vld [vmem:[#allocation2 + $0x8] sm:$0xff]
      %v605 = vld [vmem:[#allocation2 + $0x10] sm:$0xff]
      %v606 = vld [vmem:[#allocation2 + $0x18] sm:$0xff]
      %v607 = vld [vmem:[#allocation2 + $0x20] sm:$0xff]
      %v608 = vld [vmem:[#allocation2 + $0x28] sm:$0xff]
      %v609 = vld [vmem:[#allocation2 + $0x30] sm:$0xff]
      %v610 = vld [vmem:[#allocation2 + $0x38] sm:$0xff]
      %v611 = vld [vmem:[%s6] sm:$0x1]
      %613 = vset.pattern.permute.xlu0 0
      %614 = vperm.xlu0 %613, %v603
      %v615 = vpop.permute.xlu0 %614
      %618 = vset.pattern.permute.xlu0 0
      %619 = vperm.xlu0 %618, %v604
      %v620 = vpop.permute.xlu0 %619
      %623 = vset.pattern.permute.xlu0 0
      %624 = vperm.xlu0 %623, %v605
      %v625 = vpop.permute.xlu0 %624
      %628 = vset.pattern.permute.xlu0 0
      %629 = vperm.xlu0 %628, %v606
      %v630 = vpop.permute.xlu0 %629
      %633 = vset.pattern.permute.xlu0 0
      %634 = vperm.xlu0 %633, %v607
      %v635 = vpop.permute.xlu0 %634
      %638 = vset.pattern.permute.xlu0 0
      %639 = vperm.xlu0 %638, %v608
      %v640 = vpop.permute.xlu0 %639
      %643 = vset.pattern.permute.xlu0 0
      %644 = vperm.xlu0 %643, %v609
      %v645 = vpop.permute.xlu0 %644
      %648 = vset.pattern.permute.xlu0 0
      %649 = vperm.xlu0 %648, %v610
      %v650 = vpop.permute.xlu0 %649
      %v652 = vperm.slane %v611, 0
      %v653 = vmul.f32 %v615, %v652
      %v654 = vmul.f32 %v620, %v652
      %v655 = vmul.f32 %v625, %v652
      %v656 = vmul.f32 %v630, %v652
      %v657 = vmul.f32 %v635, %v652
      %v658 = vmul.f32 %v640, %v652
      %v659 = vmul.f32 %v645, %v652
      %v660 = vmul.f32 %v650, %v652
      %v661 = vld [vmem:[%s6 + $0x1] sm:$0x1]
      %662 = vset.pattern.permute.xlu0 1
      %663 = vperm.xlu0 %662, %v603
      %v664 = vpop.permute.xlu0 %663
      %666 = vset.pattern.permute.xlu0 1
      %667 = vperm.xlu0 %666, %v604
      %v668 = vpop.permute.xlu0 %667
      %670 = vset.pattern.permute.xlu0 1
      %671 = vperm.xlu0 %670, %v605
      %v672 = vpop.permute.xlu0 %671
      %674 = vset.pattern.permute.xlu0 1
      %675 = vperm.xlu0 %674, %v606
      %v676 = vpop.permute.xlu0 %675
      %678 = vset.pattern.permute.xlu0 1
      %679 = vperm.xlu0 %678, %v607
      %v680 = vpop.permute.xlu0 %679
      %682 = vset.pattern.permute.xlu0 1
      %683 = vperm.xlu0 %682, %v608
      %v684 = vpop.permute.xlu0 %683
      %686 = vset.pattern.permute.xlu0 1
      %687 = vperm.xlu0 %686, %v609
      %v688 = vpop.permute.xlu0 %687
      %690 = vset.pattern.permute.xlu0 1
      %691 = vperm.xlu0 %690, %v610
      %v692 = vpop.permute.xlu0 %691
      %v694 = vperm.slane %v661, 0
      %v695 = vmul.f32 %v664, %v694
      %v696 = vmul.f32 %v668, %v694
      %v697 = vmul.f32 %v672, %v694
      %v698 = vmul.f32 %v676, %v694
      %v699 = vmul.f32 %v680, %v694
      %v700 = vmul.f32 %v684, %v694
      %v701 = vmul.f32 %v688, %v694
      %v702 = vmul.f32 %v692, %v694
      %v703 = vadd.f32 %v653, %v695
      %v704 = vadd.f32 %v654, %v696
      %v705 = vadd.f32 %v655, %v697
      %v706 = vadd.f32 %v656, %v698
      %v707 = vadd.f32 %v657, %v699
      %v708 = vadd.f32 %v658, %v700
      %v709 = vadd.f32 %v659, %v701
      %v710 = vadd.f32 %v660, %v702
      %v711 = vld [vmem:[%s6 + $0x2] sm:$0x1]
      %712 = vset.pattern.permute.xlu0 2
      %713 = vperm.xlu0 %712, %v603
      %v714 = vpop.permute.xlu0 %713
      %716 = vset.pattern.permute.xlu0 2
      %717 = vperm.xlu0 %716, %v604
      %v718 = vpop.permute.xlu0 %717
      %720 = vset.pattern.permute.xlu0 2
      %721 = vperm.xlu0 %720, %v605
      %v722 = vpop.permute.xlu0 %721
      %724 = vset.pattern.permute.xlu0 2
      %725 = vperm.xlu0 %724, %v606
      %v726 = vpop.permute.xlu0 %725
      %728 = vset.pattern.permute.xlu0 2
      %729 = vperm.xlu0 %728, %v607
      %v730 = vpop.permute.xlu0 %729
      %732 = vset.pattern.permute.xlu0 2
      %733 = vperm.xlu0 %732, %v608
      %v734 = vpop.permute.xlu0 %733
      %736 = vset.pattern.permute.xlu0 2
      %737 = vperm.xlu0 %736, %v609
      %v738 = vpop.permute.xlu0 %737
      %740 = vset.pattern.permute.xlu0 2
      %741 = vperm.xlu0 %740, %v610
      %v742 = vpop.permute.xlu0 %741
      %v744 = vperm.slane %v711, 0
      %v745 = vmul.f32 %v714, %v744
      %v746 = vmul.f32 %v718, %v744
      %v747 = vmul.f32 %v722, %v744
      %v748 = vmul.f32 %v726, %v744
      %v749 = vmul.f32 %v730, %v744
      %v750 = vmul.f32 %v734, %v744
      %v751 = vmul.f32 %v738, %v744
      %v752 = vmul.f32 %v742, %v744
      %v753 = vadd.f32 %v703, %v745
      %v754 = vadd.f32 %v704, %v746
      %v755 = vadd.f32 %v705, %v747
      %v756 = vadd.f32 %v706, %v748
      %v757 = vadd.f32 %v707, %v749
      %v758 = vadd.f32 %v708, %v750
      %v759 = vadd.f32 %v709, %v751
      %v760 = vadd.f32 %v710, %v752
      %v761 = vld [vmem:[%s6 + $0x3] sm:$0x1]
      %762 = vset.pattern.permute.xlu0 3
      %763 = vperm.xlu0 %762, %v603
      %v764 = vpop.permute.xlu0 %763
      %766 = vset.pattern.permute.xlu0 3
      %767 = vperm.xlu0 %766, %v604
      %v768 = vpop.permute.xlu0 %767
      %770 = vset.pattern.permute.xlu0 3
      %771 = vperm.xlu0 %770, %v605
      %v772 = vpop.permute.xlu0 %771
      %774 = vset.pattern.permute.xlu0 3
      %775 = vperm.xlu0 %774, %v606
      %v776 = vpop.permute.xlu0 %775
      %778 = vset.pattern.permute.xlu0 3
      %779 = vperm.xlu0 %778, %v607
      %v780 = vpop.permute.xlu0 %779
      %782 = vset.pattern.permute.xlu0 3
      %783 = vperm.xlu0 %782, %v608
      %v784 = vpop.permute.xlu0 %783
      %786 = vset.pattern.permute.xlu0 3
      %787 = vperm.xlu0 %786, %v609
      %v788 = vpop.permute.xlu0 %787
      %790 = vset.pattern.permute.xlu0 3
      %791 = vperm.xlu0 %790, %v610
      %v792 = vpop.permute.xlu0 %791
      %v794 = vperm.slane %v761, 0
      %v795 = vmul.f32 %v764, %v794
      %v796 = vmul.f32 %v768, %v794
      %v797 = vmul.f32 %v772, %v794
      %v798 = vmul.f32 %v776, %v794
      %v799 = vmul.f32 %v780, %v794
      %v800 = vmul.f32 %v784, %v794
      %v801 = vmul.f32 %v788, %v794
      %v802 = vmul.f32 %v792, %v794
      %v803 = vadd.f32 %v753, %v795
      %v804 = vadd.f32 %v754, %v796
      %v805 = vadd.f32 %v755, %v797
      %v806 = vadd.f32 %v756, %v798
      %v807 = vadd.f32 %v757, %v799
      %v808 = vadd.f32 %v758, %v800
      %v809 = vadd.f32 %v759, %v801
      %v810 = vadd.f32 %v760, %v802
      %v811 = vld [vmem:[#allocation3] sm:$0xff]
      %v812 = vld [vmem:[#allocation3 + $0x8] sm:$0xff]
      %vm813 = vcmask 261120
      %v815 = vsel %vm813, %v803, 0
      %v818 = vsel %vm813, %v804, 0
      %v821 = vsel %vm813, %v805, 0
      %v824 = vsel %vm813, %v806, 0
      %v827 = vsel %vm813, %v807, 0
      %v830 = vsel %vm813, %v808, 0
      %v833 = vsel %vm813, %v809, 0
      %v836 = vsel %vm813, %v810, 0
      %v839 = vsel %vm813, %v811, 0
      %v842 = vsel %vm813, %v812, 0
      %844 = vmatpush.xpose.msra.mxu0 0.0
      %845 = vmatpush.xpose.msra.mxu0 0.0
      %846 = vmatpush.xpose.msra.mxu0 0.0
      %847 = vmatpush.xpose.msra.mxu0 0.0
      %848 = vmatpush.xpose.msra.mxu0 0.0
      %849 = vmatpush.xpose.msra.mxu0 0.0
      %850 = vmatpush.xpose.msra.mxu0 0.0
      %851 = vmatpush.xpose.msra.mxu0 0.0
      %852 = vmatpush.xpose.msra.mxu0 0.0
      %853 = vmatpush.xpose.msra.mxu0 0.0
      %854 = vmatpush.xpose.msra.mxu0 0.0
      %855 = vmatpush.xpose.msra.mxu0 0.0
      %856 = vmatpush.xpose.msra.mxu0 0.0
      %857 = vmatpush.xpose.msra.mxu0 0.0
      %858 = vmatpush.xpose.msra.mxu0 %v842
      %859 = vmatpush.xpose.msra.mxu0 %v839
      %860 = vmatmul.f32.gmra.mxu0 %v815
      %v861 = vpop.f32.mrf.mxu0
      %v862 = vadd.f32 0.0, %v861
      %863 = vmatmul.f32.gmra.mxu0 %v818
      %v864 = vpop.f32.mrf.mxu0
      %v865 = vadd.f32 0.0, %v864
      %866 = vmatmul.f32.gmra.mxu0 %v821
      %v867 = vpop.f32.mrf.mxu0
      %v868 = vadd.f32 0.0, %v867
      %869 = vmatmul.f32.gmra.mxu0 %v824
      %v870 = vpop.f32.mrf.mxu0
      %v871 = vadd.f32 0.0, %v870
      %872 = vmatmul.f32.gmra.mxu0 %v827
      %v873 = vpop.f32.mrf.mxu0
      %v874 = vadd.f32 0.0, %v873
      %875 = vmatmul.f32.gmra.mxu0 %v830
      %v876 = vpop.f32.mrf.mxu0
      %v877 = vadd.f32 0.0, %v876
      %878 = vmatmul.f32.gmra.mxu0 %v833
      %v879 = vpop.f32.mrf.mxu0
      %v880 = vadd.f32 0.0, %v879
      %881 = vmatmul.f32.gmra.mxu0 %v836
      %v882 = vpop.f32.mrf.mxu0
      %v883 = vadd.f32 0.0, %v882
      %884 = vdwg.mxu0
      %v885 = vmul.f32 %v862, 0.17677669
      %v886 = vmul.f32 %v865, 0.17677669
      %v887 = vmul.f32 %v868, 0.17677669
      %v888 = vmul.f32 %v871, 0.17677669
      %v889 = vmul.f32 %v874, 0.17677669
      %v890 = vmul.f32 %v877, 0.17677669
      %v891 = vmul.f32 %v880, 0.17677669
      %v892 = vmul.f32 %v883, 0.17677669
      %v893 = vlaneseq
      %v894 = vand.u32 %v893, 127
      %vm895 = vcmp.lt.s32.totalorder %v894, 8
      %v896 = vsel %vm895, %v885, -1e+30
      %v897 = vsel %vm895, %v886, -1e+30
      %v898 = vsel %vm895, %v887, -1e+30
      %v899 = vsel %vm895, %v888, -1e+30
      %v900 = vsel %vm895, %v889, -1e+30
      %v901 = vsel %vm895, %v890, -1e+30
      %v902 = vsel %vm895, %v891, -1e+30
      %v903 = vsel %vm895, %v892, -1e+30
      %vm904 = vcmask 130048
      %v905 = vsel %vm904, %v896, -inf
      %906 = vmax.xlane.f32.xlu0 %v905
      %v907 = vpop.xlane.xlu0 %906
      %v908 = vsel %vm904, %v897, -inf
      %909 = vmax.xlane.f32.xlu0 %v908
      %v910 = vpop.xlane.xlu0 %909
      %v911 = vsel %vm904, %v898, -inf
      %912 = vmax.xlane.f32.xlu0 %v911
      %v913 = vpop.xlane.xlu0 %912
      %v914 = vsel %vm904, %v899, -inf
      %915 = vmax.xlane.f32.xlu0 %v914
      %v916 = vpop.xlane.xlu0 %915
      %v917 = vsel %vm904, %v900, -inf
      %918 = vmax.xlane.f32.xlu0 %v917
      %v919 = vpop.xlane.xlu0 %918
      %v920 = vsel %vm904, %v901, -inf
      %921 = vmax.xlane.f32.xlu0 %v920
      %v922 = vpop.xlane.xlu0 %921
      %v923 = vsel %vm904, %v902, -inf
      %924 = vmax.xlane.f32.xlu0 %v923
      %v925 = vpop.xlane.xlu0 %924
      %v926 = vsel %vm904, %v903, -inf
      %927 = vmax.xlane.f32.xlu0 %v926
      %v928 = vpop.xlane.xlu0 %927
      %v929 = vsel %vm895, -1e+30, %v885
      %v930 = vsel %vm895, -1e+30, %v886
      %v931 = vsel %vm895, -1e+30, %v887
      %v932 = vsel %vm895, -1e+30, %v888
      %v933 = vsel %vm895, -1e+30, %v889
      %v934 = vsel %vm895, -1e+30, %v890
      %v935 = vsel %vm895, -1e+30, %v891
      %v936 = vsel %vm895, -1e+30, %v892
      %v937 = vsel %vm904, %v929, -inf
      %938 = vmax.xlane.f32.xlu0 %v937
      %v939 = vpop.xlane.xlu0 %938
      %v940 = vsel %vm904, %v930, -inf
      %941 = vmax.xlane.f32.xlu0 %v940
      %v942 = vpop.xlane.xlu0 %941
      %v943 = vsel %vm904, %v931, -inf
      %944 = vmax.xlane.f32.xlu0 %v943
      %v945 = vpop.xlane.xlu0 %944
      %v946 = vsel %vm904, %v932, -inf
      %947 = vmax.xlane.f32.xlu0 %v946
      %v948 = vpop.xlane.xlu0 %947
      %v949 = vsel %vm904, %v933, -inf
      %950 = vmax.xlane.f32.xlu0 %v949
      %v951 = vpop.xlane.xlu0 %950
      %v952 = vsel %vm904, %v934, -inf
      %953 = vmax.xlane.f32.xlu0 %v952
      %v954 = vpop.xlane.xlu0 %953
      %v955 = vsel %vm904, %v935, -inf
      %956 = vmax.xlane.f32.xlu0 %v955
      %v957 = vpop.xlane.xlu0 %956
      %v958 = vsel %vm904, %v936, -inf
      %959 = vmax.xlane.f32.xlu0 %v958
      %v960 = vpop.xlane.xlu0 %959
      %v961 = vsel %vm895, %v907, %v939
      %v962 = vsel %vm895, %v910, %v942
      %v963 = vsel %vm895, %v913, %v945
      %v964 = vsel %vm895, %v916, %v948
      %v965 = vsel %vm895, %v919, %v951
      %v966 = vsel %vm895, %v922, %v954
      %v967 = vsel %vm895, %v925, %v957
      %v968 = vsel %vm895, %v928, %v960
      %v969 = vsub.f32 %v885, %v961
      %v970 = vsub.f32 %v886, %v962
      %v971 = vsub.f32 %v887, %v963
      %v972 = vsub.f32 %v888, %v964
      %v973 = vsub.f32 %v889, %v965
      %v974 = vsub.f32 %v890, %v966
      %v975 = vsub.f32 %v891, %v967
      %v976 = vsub.f32 %v892, %v968
      %v977 = vmul.f32 %v969, 1.442695
      %v978 = vpow.pop %v977
      %v979 = vmul.f32 %v970, 1.442695
      %v980 = vpow.pop %v979
      %v981 = vmul.f32 %v971, 1.442695
      %v982 = vpow.pop %v981
      %v983 = vmul.f32 %v972, 1.442695
      %v984 = vpow.pop %v983
      %v985 = vmul.f32 %v973, 1.442695
      %v986 = vpow.pop %v985
      %v987 = vmul.f32 %v974, 1.442695
      %v988 = vpow.pop %v987
      %v989 = vmul.f32 %v975, 1.442695
      %v990 = vpow.pop %v989
      %v991 = vmul.f32 %v976, 1.442695
      %v992 = vpow.pop %v991
      %v993 = vsel %vm895, %v978, 0.0
      %v994 = vsel %vm895, %v980, 0.0
      %v995 = vsel %vm895, %v982, 0.0
      %v996 = vsel %vm895, %v984, 0.0
      %v997 = vsel %vm895, %v986, 0.0
      %v998 = vsel %vm895, %v988, 0.0
      %v999 = vsel %vm895, %v990, 0.0
      %v1000 = vsel %vm895, %v992, 0.0
      %v1001 = vsel %vm904, %v993, 0.0
      %1002 = vadd.xlane.f32.xlu0 %v1001
      %v1003 = vpop.xlane.xlu0 %1002
      %v1004 = vsel %vm904, %v994, 0.0
      %1005 = vadd.xlane.f32.xlu0 %v1004
      %v1006 = vpop.xlane.xlu0 %1005
      %v1007 = vsel %vm904, %v995, 0.0
      %1008 = vadd.xlane.f32.xlu0 %v1007
      %v1009 = vpop.xlane.xlu0 %1008
      %v1010 = vsel %vm904, %v996, 0.0
      %1011 = vadd.xlane.f32.xlu0 %v1010
      %v1012 = vpop.xlane.xlu0 %1011
      %v1013 = vsel %vm904, %v997, 0.0
      %1014 = vadd.xlane.f32.xlu0 %v1013
      %v1015 = vpop.xlane.xlu0 %1014
      %v1016 = vsel %vm904, %v998, 0.0
      %1017 = vadd.xlane.f32.xlu0 %v1016
      %v1018 = vpop.xlane.xlu0 %1017
      %v1019 = vsel %vm904, %v999, 0.0
      %1020 = vadd.xlane.f32.xlu0 %v1019
      %v1021 = vpop.xlane.xlu0 %1020
      %v1022 = vsel %vm904, %v1000, 0.0
      %1023 = vadd.xlane.f32.xlu0 %v1022
      %v1024 = vpop.xlane.xlu0 %1023
      %v1025 = vsel %vm895, 0.0, %v978
      %v1026 = vsel %vm895, 0.0, %v980
      %v1027 = vsel %vm895, 0.0, %v982
      %v1028 = vsel %vm895, 0.0, %v984
      %v1029 = vsel %vm895, 0.0, %v986
      %v1030 = vsel %vm895, 0.0, %v988
      %v1031 = vsel %vm895, 0.0, %v990
      %v1032 = vsel %vm895, 0.0, %v992
      %v1033 = vsel %vm904, %v1025, 0.0
      %1034 = vadd.xlane.f32.xlu0 %v1033
      %v1035 = vpop.xlane.xlu0 %1034
      %v1036 = vsel %vm904, %v1026, 0.0
      %1037 = vadd.xlane.f32.xlu0 %v1036
      %v1038 = vpop.xlane.xlu0 %1037
      %v1039 = vsel %vm904, %v1027, 0.0
      %1040 = vadd.xlane.f32.xlu0 %v1039
      %v1041 = vpop.xlane.xlu0 %1040
      %v1042 = vsel %vm904, %v1028, 0.0
      %1043 = vadd.xlane.f32.xlu0 %v1042
      %v1044 = vpop.xlane.xlu0 %1043
      %v1045 = vsel %vm904, %v1029, 0.0
      %1046 = vadd.xlane.f32.xlu0 %v1045
      %v1047 = vpop.xlane.xlu0 %1046
      %v1048 = vsel %vm904, %v1030, 0.0
      %1049 = vadd.xlane.f32.xlu0 %v1048
      %v1050 = vpop.xlane.xlu0 %1049
      %v1051 = vsel %vm904, %v1031, 0.0
      %1052 = vadd.xlane.f32.xlu0 %v1051
      %v1053 = vpop.xlane.xlu0 %1052
      %v1054 = vsel %vm904, %v1032, 0.0
      %1055 = vadd.xlane.f32.xlu0 %v1054
      %v1056 = vpop.xlane.xlu0 %1055
      %v1057 = vrcp.pop %v1003
      %v1058 = vrcp.pop %v1006
      %v1059 = vrcp.pop %v1009
      %v1060 = vrcp.pop %v1012
      %v1061 = vrcp.pop %v1015
      %v1062 = vrcp.pop %v1018
      %v1063 = vrcp.pop %v1021
      %v1064 = vrcp.pop %v1024
      %v1065 = vstv %s602
      %v1066 = vmul.f32 %v1065, %v1057
      %v1067 = vmul.f32 %v1065, %v1058
      %v1068 = vmul.f32 %v1065, %v1059
      %v1069 = vmul.f32 %v1065, %v1060
      %v1070 = vmul.f32 %v1065, %v1061
      %v1071 = vmul.f32 %v1065, %v1062
      %v1072 = vmul.f32 %v1065, %v1063
      %v1073 = vmul.f32 %v1065, %v1064
      %v1074 = vrcp.pop %v1035
      %v1075 = vrcp.pop %v1038
      %v1076 = vrcp.pop %v1041
      %v1077 = vrcp.pop %v1044
      %v1078 = vrcp.pop %v1047
      %v1079 = vrcp.pop %v1050
      %v1080 = vrcp.pop %v1053
      %v1081 = vrcp.pop %v1056
      %v1082 = vstv %s600
      %v1083 = vmul.f32 %v1082, %v1074
      %v1084 = vmul.f32 %v1082, %v1075
      %v1085 = vmul.f32 %v1082, %v1076
      %v1086 = vmul.f32 %v1082, %v1077
      %v1087 = vmul.f32 %v1082, %v1078
      %v1088 = vmul.f32 %v1082, %v1079
      %v1089 = vmul.f32 %v1082, %v1080
      %v1090 = vmul.f32 %v1082, %v1081
      %v1091 = vsel %vm895, %v1066, %v1083
      %v1092 = vsel %vm895, %v1067, %v1084
      %v1093 = vsel %vm895, %v1068, %v1085
      %v1094 = vsel %vm895, %v1069, %v1086
      %v1095 = vsel %vm895, %v1070, %v1087
      %v1096 = vsel %vm895, %v1071, %v1088
      %v1097 = vsel %vm895, %v1072, %v1089
      %v1098 = vsel %vm895, %v1073, %v1090
      %v1099 = vmul.f32 %v978, %v1091
      %v1100 = vmul.f32 %v980, %v1092
      %v1101 = vmul.f32 %v982, %v1093
      %v1102 = vmul.f32 %v984, %v1094
      %v1103 = vmul.f32 %v986, %v1095
      %v1104 = vmul.f32 %v988, %v1096
      %v1105 = vmul.f32 %v990, %v1097
      %v1106 = vmul.f32 %v992, %v1098
      %v1107 = vld [vmem:[#allocation4] sm:$0xff]
      %v1108 = vld [vmem:[#allocation4 + $0x8] sm:$0xff]
      %v1110 = vsel %vm904, %v1099, 0
      %v1113 = vsel %vm904, %v1100, 0
      %v1116 = vsel %vm904, %v1101, 0
      %v1119 = vsel %vm904, %v1102, 0
      %v1122 = vsel %vm904, %v1103, 0
      %v1125 = vsel %vm904, %v1104, 0
      %v1128 = vsel %vm904, %v1105, 0
      %v1131 = vsel %vm904, %v1106, 0
      %1133 = vmatpush.msra.mxu0 0.0
      %1134 = vmatpush.msra.mxu0 0.0
      %1135 = vmatpush.msra.mxu0 0.0
      %1136 = vmatpush.msra.mxu0 0.0
      %1137 = vmatpush.msra.mxu0 0.0
      %1138 = vmatpush.msra.mxu0 0.0
      %1139 = vmatpush.msra.mxu0 0.0
      %1140 = vmatpush.msra.mxu0 0.0
      %1141 = vmatpush.msra.mxu0 0.0
      %1142 = vmatpush.msra.mxu0 0.0
      %1143 = vmatpush.msra.mxu0 0.0
      %1144 = vmatpush.msra.mxu0 0.0
      %1145 = vmatpush.msra.mxu0 0.0
      %1146 = vmatpush.msra.mxu0 0.0
      %1147 = vmatpush.msra.mxu0 %v1108
      %1148 = vmatpush.msra.mxu0 %v1107
      %1149 = vmatmul.f32.gmra.mxu0 %v1110
      %v1150 = vpop.f32.mrf.mxu0
      %v1151 = vadd.f32 0.0, %v1150
      %1152 = vmatmul.f32.gmra.mxu0 %v1113
      %v1153 = vpop.f32.mrf.mxu0
      %v1154 = vadd.f32 0.0, %v1153
      %1155 = vmatmul.f32.gmra.mxu0 %v1116
      %v1156 = vpop.f32.mrf.mxu0
      %v1157 = vadd.f32 0.0, %v1156
      %1158 = vmatmul.f32.gmra.mxu0 %v1119
      %v1159 = vpop.f32.mrf.mxu0
      %v1160 = vadd.f32 0.0, %v1159
      %1161 = vmatmul.f32.gmra.mxu0 %v1122
      %v1162 = vpop.f32.mrf.mxu0
      %v1163 = vadd.f32 0.0, %v1162
      %1164 = vmatmul.f32.gmra.mxu0 %v1125
      %v1165 = vpop.f32.mrf.mxu0
      %v1166 = vadd.f32 0.0, %v1165
      %1167 = vmatmul.f32.gmra.mxu0 %v1128
      %v1168 = vpop.f32.mrf.mxu0
      %v1169 = vadd.f32 0.0, %v1168
      %1170 = vmatmul.f32.gmra.mxu0 %v1131
      %v1171 = vpop.f32.mrf.mxu0
      %v1172 = vadd.f32 0.0, %v1171
      %1173 = vdwg.mxu0
      %v1174 = vld [vmem:[%s9] sm:$0xff]
      %v1175 = vld [vmem:[%s9 + $0x8] sm:$0xff]
      %v1176 = vld [vmem:[%s9 + $0x10] sm:$0xff]
      %v1177 = vld [vmem:[%s9 + $0x18] sm:$0xff]
      %s1178 = scalar_lea.vmem %s3, %s38
      %v1179 = vld [vmem:[%s1178] sm:$0x1]
      %v1181 = vperm.slane %v1179, 0
      %v1184 = vsel %vm813, %v1151, 0
      %v1187 = vsel %vm813, %v1154, 0
      %v1190 = vsel %vm813, %v1157, 0
      %v1193 = vsel %vm813, %v1160, 0
      %v1196 = vsel %vm813, %v1163, 0
      %v1199 = vsel %vm813, %v1166, 0
      %v1202 = vsel %vm813, %v1169, 0
      %v1205 = vsel %vm813, %v1172, 0
      %1207 = vmatpush.msra.mxu0 0.0
      %1208 = vmatpush.msra.mxu0 0.0
      %1209 = vmatpush.msra.mxu0 0.0
      %1210 = vmatpush.msra.mxu0 0.0
      %1211 = vmatpush.msra.mxu0 0.0
      %1212 = vmatpush.msra.mxu0 0.0
      %1213 = vmatpush.msra.mxu0 0.0
      %1214 = vmatpush.msra.mxu0 0.0
      %1215 = vmatpush.msra.mxu0 0.0
      %1216 = vmatpush.msra.mxu0 0.0
      %1217 = vmatpush.msra.mxu0 0.0
      %1218 = vmatpush.msra.mxu0 0.0
      %1219 = vmatpush.msra.mxu0 %v1177
      %1220 = vmatpush.msra.mxu0 %v1176
      %1221 = vmatpush.msra.mxu0 %v1175
      %1222 = vmatpush.msra.mxu0 %v1174
      %1223 = vmatmul.f32.gmra.mxu0 %v1184
      %v1224 = vpop.f32.mrf.mxu0
      %v1225 = vadd.f32 %v1181, %v1224
      %1226 = vmatmul.f32.gmra.mxu0 %v1187
      %v1227 = vpop.f32.mrf.mxu0
      %v1228 = vadd.f32 %v1181, %v1227
      %1229 = vmatmul.f32.gmra.mxu0 %v1190
      %v1230 = vpop.f32.mrf.mxu0
      %v1231 = vadd.f32 %v1181, %v1230
      %1232 = vmatmul.f32.gmra.mxu0 %v1193
      %v1233 = vpop.f32.mrf.mxu0
      %v1234 = vadd.f32 %v1181, %v1233
      %1235 = vmatmul.f32.gmra.mxu0 %v1196
      %v1236 = vpop.f32.mrf.mxu0
      %v1237 = vadd.f32 %v1181, %v1236
      %1238 = vmatmul.f32.gmra.mxu0 %v1199
      %v1239 = vpop.f32.mrf.mxu0
      %v1240 = vadd.f32 %v1181, %v1239
      %1241 = vmatmul.f32.gmra.mxu0 %v1202
      %v1242 = vpop.f32.mrf.mxu0
      %v1243 = vadd.f32 %v1181, %v1242
      %1244 = vmatmul.f32.gmra.mxu0 %v1205
      %v1245 = vpop.f32.mrf.mxu0
      %v1246 = vadd.f32 %v1181, %v1245
      %1247 = vdwg.mxu0
      %v1248 = vstv %s596
      %v1249 = vmul.f32 %v1248, %v603
      %v1250 = vmul.f32 %v1248, %v604
      %v1251 = vmul.f32 %v1248, %v605
      %v1252 = vmul.f32 %v1248, %v606
      %v1253 = vmul.f32 %v1248, %v607
      %v1254 = vmul.f32 %v1248, %v608
      %v1255 = vmul.f32 %v1248, %v609
      %v1256 = vmul.f32 %v1248, %v610
      %v1257 = vstv %s598
      %v1258 = vmul.f32 %v1257, %v1225
      %v1259 = vmul.f32 %v1257, %v1228
      %v1260 = vmul.f32 %v1257, %v1231
      %v1261 = vmul.f32 %v1257, %v1234
      %v1262 = vmul.f32 %v1257, %v1237
      %v1263 = vmul.f32 %v1257, %v1240
      %v1264 = vmul.f32 %v1257, %v1243
      %v1265 = vmul.f32 %v1257, %v1246
      %v1266 = vadd.f32 %v1249, %v1258
      %v1267 = vadd.f32 %v1250, %v1259
      %v1268 = vadd.f32 %v1251, %v1260
      %v1269 = vadd.f32 %v1252, %v1261
      %v1270 = vadd.f32 %v1253, %v1262
      %v1271 = vadd.f32 %v1254, %v1263
      %v1272 = vadd.f32 %v1255, %v1264
      %v1273 = vadd.f32 %v1256, %v1265
      %vm1274 = vcmask 31744
      %1275 = vst.msk [vmem:[#allocation2] sm:$0xff] %vm1274, %v1266
      %1276 = vst.msk [vmem:[#allocation2 + $0x8] sm:$0xff] %vm1274, %v1267
      %1277 = vst.msk [vmem:[#allocation2 + $0x10] sm:$0xff] %vm1274, %v1268
      %1278 = vst.msk [vmem:[#allocation2 + $0x18] sm:$0xff] %vm1274, %v1269
      %1279 = vst.msk [vmem:[#allocation2 + $0x20] sm:$0xff] %vm1274, %v1270
      %1280 = vst.msk [vmem:[#allocation2 + $0x28] sm:$0xff] %vm1274, %v1271
      %1281 = vst.msk [vmem:[#allocation2 + $0x30] sm:$0xff] %vm1274, %v1272
      %1282 = vst.msk [vmem:[#allocation2 + $0x38] sm:$0xff] %vm1274, %v1273
      %p1283 = scmp.eq.s32.totalorder %s38, 3
      // Predicated region
      $region69: #{_pipeline.1} parent=63 // pred_check
        %p1284 = pneg %p1283
      $region70: #{_pipeline.1} parent=63 // pred_check_branch
        %1286 = sbr.rel (%p1284) target = $region72
      $region71: #{_pipeline.1} parent=63 // pred_region
        %v1287 = vld [vmem:[#allocation2] sm:$0xff]
        %v1288 = vld [vmem:[#allocation2 + $0x8] sm:$0xff]
        %v1289 = vld [vmem:[#allocation2 + $0x10] sm:$0xff]
        %v1290 = vld [vmem:[#allocation2 + $0x18] sm:$0xff]
        %v1291 = vld [vmem:[#allocation2 + $0x20] sm:$0xff]
        %v1292 = vld [vmem:[#allocation2 + $0x28] sm:$0xff]
        %v1293 = vld [vmem:[#allocation2 + $0x30] sm:$0xff]
        %v1294 = vld [vmem:[#allocation2 + $0x38] sm:$0xff]
        %1295 = vst.msk [vmem:[%s462] sm:$0xff] %vm1274, %v1287
        %1296 = vst.msk [vmem:[%s462 + $0x8] sm:$0xff] %vm1274, %v1288
        %1297 = vst.msk [vmem:[%s462 + $0x10] sm:$0xff] %vm1274, %v1289
        %1298 = vst.msk [vmem:[%s462 + $0x18] sm:$0xff] %vm1274, %v1290
        %1299 = vst.msk [vmem:[%s462 + $0x20] sm:$0xff] %vm1274, %v1291
        %1300 = vst.msk [vmem:[%s462 + $0x28] sm:$0xff] %vm1274, %v1292
        %1301 = vst.msk [vmem:[%s462 + $0x30] sm:$0xff] %vm1274, %v1293
        %1302 = vst.msk [vmem:[%s462 + $0x38] sm:$0xff] %vm1274, %v1294
        %v1303 = vld [vmem:[#allocation2] sm:$0xff]
        %v1304 = vld [vmem:[#allocation2 + $0x8] sm:$0xff]
        %v1305 = vld [vmem:[#allocation2 + $0x10] sm:$0xff]
        %v1306 = vld [vmem:[#allocation2 + $0x18] sm:$0xff]
        %v1307 = vld [vmem:[#allocation2 + $0x20] sm:$0xff]
        %v1308 = vld [vmem:[#allocation2 + $0x28] sm:$0xff]
        %v1309 = vld [vmem:[#allocation2 + $0x30] sm:$0xff]
        %v1310 = vld [vmem:[#allocation2 + $0x38] sm:$0xff]
        %v1311 = vmul.f32 %v1303, 5.4899807
        %v1312 = vmul.f32 %v1304, 5.4899807
        %v1313 = vmul.f32 %v1305, 5.4899807
        %v1314 = vmul.f32 %v1306, 5.4899807
        %v1315 = vmul.f32 %v1307, 5.4899807
        %v1316 = vmul.f32 %v1308, 5.4899807
        %v1317 = vmul.f32 %v1309, 5.4899807
        %v1318 = vmul.f32 %v1310, 5.4899807
        %v1319 = vld [vmem:[%s10] sm:$0x1]
        %1321 = vset.pattern.permute.xlu0 0
        %1322 = vperm.xlu0 %1321, %v1311
        %v1323 = vpop.permute.xlu0 %1322
        %1326 = vset.pattern.permute.xlu0 0
        %1327 = vperm.xlu0 %1326, %v1312
        %v1328 = vpop.permute.xlu0 %1327
        %1331 = vset.pattern.permute.xlu0 0
        %1332 = vperm.xlu0 %1331, %v1313
        %v1333 = vpop.permute.xlu0 %1332
        %1336 = vset.pattern.permute.xlu0 0
        %1337 = vperm.xlu0 %1336, %v1314
        %v1338 = vpop.permute.xlu0 %1337
        %1341 = vset.pattern.permute.xlu0 0
        %1342 = vperm.xlu0 %1341, %v1315
        %v1343 = vpop.permute.xlu0 %1342
        %1346 = vset.pattern.permute.xlu0 0
        %1347 = vperm.xlu0 %1346, %v1316
        %v1348 = vpop.permute.xlu0 %1347
        %1351 = vset.pattern.permute.xlu0 0
        %1352 = vperm.xlu0 %1351, %v1317
        %v1353 = vpop.permute.xlu0 %1352
        %1356 = vset.pattern.permute.xlu0 0
        %1357 = vperm.xlu0 %1356, %v1318
        %v1358 = vpop.permute.xlu0 %1357
        %v1360 = vperm.slane %v1319, 0
        %v1361 = vmul.f32 %v1323, %v1360
        %v1362 = vmul.f32 %v1328, %v1360
        %v1363 = vmul.f32 %v1333, %v1360
        %v1364 = vmul.f32 %v1338, %v1360
        %v1365 = vmul.f32 %v1343, %v1360
        %v1366 = vmul.f32 %v1348, %v1360
        %v1367 = vmul.f32 %v1353, %v1360
        %v1368 = vmul.f32 %v1358, %v1360
        %v1369 = vld [vmem:[%s10 + $0x1] sm:$0x1]
        %1370 = vset.pattern.permute.xlu0 1
        %1371 = vperm.xlu0 %1370, %v1311
        %v1372 = vpop.permute.xlu0 %1371
        %1374 = vset.pattern.permute.xlu0 1
        %1375 = vperm.xlu0 %1374, %v1312
        %v1376 = vpop.permute.xlu0 %1375
        %1378 = vset.pattern.permute.xlu0 1
        %1379 = vperm.xlu0 %1378, %v1313
        %v1380 = vpop.permute.xlu0 %1379
        %1382 = vset.pattern.permute.xlu0 1
        %1383 = vperm.xlu0 %1382, %v1314
        %v1384 = vpop.permute.xlu0 %1383
        %1386 = vset.pattern.permute.xlu0 1
        %1387 = vperm.xlu0 %1386, %v1315
        %v1388 = vpop.permute.xlu0 %1387
        %1390 = vset.pattern.permute.xlu0 1
        %1391 = vperm.xlu0 %1390, %v1316
        %v1392 = vpop.permute.xlu0 %1391
        %1394 = vset.pattern.permute.xlu0 1
        %1395 = vperm.xlu0 %1394, %v1317
        %v1396 = vpop.permute.xlu0 %1395
        %1398 = vset.pattern.permute.xlu0 1
        %1399 = vperm.xlu0 %1398, %v1318
        %v1400 = vpop.permute.xlu0 %1399
        %v1402 = vperm.slane %v1369, 0
        %v1403 = vmul.f32 %v1372, %v1402
        %v1404 = vmul.f32 %v1376, %v1402
        %v1405 = vmul.f32 %v1380, %v1402
        %v1406 = vmul.f32 %v1384, %v1402
        %v1407 = vmul.f32 %v1388, %v1402
        %v1408 = vmul.f32 %v1392, %v1402
        %v1409 = vmul.f32 %v1396, %v1402
        %v1410 = vmul.f32 %v1400, %v1402
        %v1411 = vadd.f32 %v1361, %v1403
        %v1412 = vadd.f32 %v1362, %v1404
        %v1413 = vadd.f32 %v1363, %v1405
        %v1414 = vadd.f32 %v1364, %v1406
        %v1415 = vadd.f32 %v1365, %v1407
        %v1416 = vadd.f32 %v1366, %v1408
        %v1417 = vadd.f32 %v1367, %v1409
        %v1418 = vadd.f32 %v1368, %v1410
        %v1419 = vld [vmem:[%s10 + $0x2] sm:$0x1]
        %1420 = vset.pattern.permute.xlu0 2
        %1421 = vperm.xlu0 %1420, %v1311
        %v1422 = vpop.permute.xlu0 %1421
        %1424 = vset.pattern.permute.xlu0 2
        %1425 = vperm.xlu0 %1424, %v1312
        %v1426 = vpop.permute.xlu0 %1425
        %1428 = vset.pattern.permute.xlu0 2
        %1429 = vperm.xlu0 %1428, %v1313
        %v1430 = vpop.permute.xlu0 %1429
        %1432 = vset.pattern.permute.xlu0 2
        %1433 = vperm.xlu0 %1432, %v1314
        %v1434 = vpop.permute.xlu0 %1433
        %1436 = vset.pattern.permute.xlu0 2
        %1437 = vperm.xlu0 %1436, %v1315
        %v1438 = vpop.permute.xlu0 %1437
        %1440 = vset.pattern.permute.xlu0 2
        %1441 = vperm.xlu0 %1440, %v1316
        %v1442 = vpop.permute.xlu0 %1441
        %1444 = vset.pattern.permute.xlu0 2
        %1445 = vperm.xlu0 %1444, %v1317
        %v1446 = vpop.permute.xlu0 %1445
        %1448 = vset.pattern.permute.xlu0 2
        %1449 = vperm.xlu0 %1448, %v1318
        %v1450 = vpop.permute.xlu0 %1449
        %v1452 = vperm.slane %v1419, 0
        %v1453 = vmul.f32 %v1422, %v1452
        %v1454 = vmul.f32 %v1426, %v1452
        %v1455 = vmul.f32 %v1430, %v1452
        %v1456 = vmul.f32 %v1434, %v1452
        %v1457 = vmul.f32 %v1438, %v1452
        %v1458 = vmul.f32 %v1442, %v1452
        %v1459 = vmul.f32 %v1446, %v1452
        %v1460 = vmul.f32 %v1450, %v1452
        %v1461 = vadd.f32 %v1411, %v1453
        %v1462 = vadd.f32 %v1412, %v1454
        %v1463 = vadd.f32 %v1413, %v1455
        %v1464 = vadd.f32 %v1414, %v1456
        %v1465 = vadd.f32 %v1415, %v1457
        %v1466 = vadd.f32 %v1416, %v1458
        %v1467 = vadd.f32 %v1417, %v1459
        %v1468 = vadd.f32 %v1418, %v1460
        %v1469 = vld [vmem:[%s10 + $0x3] sm:$0x1]
        %1470 = vset.pattern.permute.xlu0 3
        %1471 = vperm.xlu0 %1470, %v1311
        %v1472 = vpop.permute.xlu0 %1471
        %1474 = vset.pattern.permute.xlu0 3
        %1475 = vperm.xlu0 %1474, %v1312
        %v1476 = vpop.permute.xlu0 %1475
        %1478 = vset.pattern.permute.xlu0 3
        %1479 = vperm.xlu0 %1478, %v1313
        %v1480 = vpop.permute.xlu0 %1479
        %1482 = vset.pattern.permute.xlu0 3
        %1483 = vperm.xlu0 %1482, %v1314
        %v1484 = vpop.permute.xlu0 %1483
        %1486 = vset.pattern.permute.xlu0 3
        %1487 = vperm.xlu0 %1486, %v1315
        %v1488 = vpop.permute.xlu0 %1487
        %1490 = vset.pattern.permute.xlu0 3
        %1491 = vperm.xlu0 %1490, %v1316
        %v1492 = vpop.permute.xlu0 %1491
        %1494 = vset.pattern.permute.xlu0 3
        %1495 = vperm.xlu0 %1494, %v1317
        %v1496 = vpop.permute.xlu0 %1495
        %1498 = vset.pattern.permute.xlu0 3
        %1499 = vperm.xlu0 %1498, %v1318
        %v1500 = vpop.permute.xlu0 %1499
        %v1502 = vperm.slane %v1469, 0
        %v1503 = vmul.f32 %v1472, %v1502
        %v1504 = vmul.f32 %v1476, %v1502
        %v1505 = vmul.f32 %v1480, %v1502
        %v1506 = vmul.f32 %v1484, %v1502
        %v1507 = vmul.f32 %v1488, %v1502
        %v1508 = vmul.f32 %v1492, %v1502
        %v1509 = vmul.f32 %v1496, %v1502
        %v1510 = vmul.f32 %v1500, %v1502
        %v1511 = vadd.f32 %v1461, %v1503
        %v1512 = vadd.f32 %v1462, %v1504
        %v1513 = vadd.f32 %v1463, %v1505
        %v1514 = vadd.f32 %v1464, %v1506
        %v1515 = vadd.f32 %v1465, %v1507
        %v1516 = vadd.f32 %v1466, %v1508
        %v1517 = vadd.f32 %v1467, %v1509
        %v1518 = vadd.f32 %v1468, %v1510
        %v1519 = vld [vmem:[%s11] sm:$0x1]
        %v1521 = vperm.slane %v1519, 0
        %v1523 = vadd.f32 %v1511, %v1521
        %v1524 = vadd.f32 %v1512, %v1521
        %v1525 = vadd.f32 %v1513, %v1521
        %v1526 = vadd.f32 %v1514, %v1521
        %v1527 = vadd.f32 %v1515, %v1521
        %v1528 = vadd.f32 %v1516, %v1521
        %v1529 = vadd.f32 %v1517, %v1521
        %v1530 = vadd.f32 %v1518, %v1521
        %v1531 = vmul.f32 %v1523, 0.5
        %v1532 = vmul.f32 %v1524, 0.5
        %v1533 = vmul.f32 %v1525, 0.5
        %v1534 = vmul.f32 %v1526, 0.5
        %v1535 = vmul.f32 %v1527, 0.5
        %v1536 = vmul.f32 %v1528, 0.5
        %v1537 = vmul.f32 %v1529, 0.5
        %v1538 = vmul.f32 %v1530, 0.5
        %v1539 = vadd.f32 %v1531, 0.5
        %v1540 = vadd.f32 %v1532, 0.5
        %v1541 = vadd.f32 %v1533, 0.5
        %v1542 = vadd.f32 %v1534, 0.5
        %v1543 = vadd.f32 %v1535, 0.5
        %v1544 = vadd.f32 %v1536, 0.5
        %v1545 = vadd.f32 %v1537, 0.5
        %v1546 = vadd.f32 %v1538, 0.5
        %v1547 = vmax.f32 %v1539, 0.0
        %v1548 = vmax.f32 %v1540, 0.0
        %v1549 = vmax.f32 %v1541, 0.0
        %v1550 = vmax.f32 %v1542, 0.0
        %v1551 = vmax.f32 %v1543, 0.0
        %v1552 = vmax.f32 %v1544, 0.0
        %v1553 = vmax.f32 %v1545, 0.0
        %v1554 = vmax.f32 %v1546, 0.0
        %v1555 = vmin.f32 %v1547, 1.0
        %v1556 = vmin.f32 %v1548, 1.0
        %v1557 = vmin.f32 %v1549, 1.0
        %v1558 = vmin.f32 %v1550, 1.0
        %v1559 = vmin.f32 %v1551, 1.0
        %v1560 = vmin.f32 %v1552, 1.0
        %v1561 = vmin.f32 %v1553, 1.0
        %v1562 = vmin.f32 %v1554, 1.0
        %vm1563 = vcmask 23552
        %1564 = vst.msk [vmem:[%s467] sm:$0xff] %vm1563, %v1555
        %1565 = vst.msk [vmem:[%s467 + $0x8] sm:$0xff] %vm1563, %v1556
        %1566 = vst.msk [vmem:[%s467 + $0x10] sm:$0xff] %vm1563, %v1557
        %1567 = vst.msk [vmem:[%s467 + $0x18] sm:$0xff] %vm1563, %v1558
        %1568 = vst.msk [vmem:[%s467 + $0x20] sm:$0xff] %vm1563, %v1559
        %1569 = vst.msk [vmem:[%s467 + $0x28] sm:$0xff] %vm1563, %v1560
        %1570 = vst.msk [vmem:[%s467 + $0x30] sm:$0xff] %vm1563, %v1561
        %1571 = vst.msk [vmem:[%s467 + $0x38] sm:$0xff] %vm1563, %v1562
      $region72: #{_pipeline.1} parent=63 // pred_fallthru
        _
      %p1572 = scmp.lt.s32.totalorder %s37, 1
      %s1573 = scalar_select %p1572, %s37, 1
      %s1574 = smul.addr %s1573, 8
      %s1575 = smul.addr %s1574, 8
      %s1576 = scalar_lea.vmem %s12, %s1575
      %p1577 = scmp.lt.s32.totalorder %s37, 1
      %s1578 = scalar_select %p1577, %s37, 1
      %s1579 = smul.addr %s1578, 8
      %s1580 = smul.addr %s1579, 8
      %s1581 = scalar_lea.vmem %s13, %s1580
      // Predicated region
      $region73: #{_pipeline.1} parent=63 // pred_check
        %p1582 = pneg %p304
      $region74: #{_pipeline.1} parent=63 // pred_check_branch
        %1584 = sbr.rel (%p1582) target = $region76
      $region75: #{_pipeline.1} parent=63 // pred_region
        _
      $region76: #{_pipeline.1} parent=63 // pred_fallthru
        _
      // Predicated region
      $region77: #{_pipeline.1} parent=63 // pred_check
        %p1585 = pneg %p330
      $region78: #{_pipeline.1} parent=63 // pred_check_branch
        %1587 = sbr.rel (%p1585) target = $region80
      $region79: #{_pipeline.1} parent=63 // pred_region
        _
      $region80: #{_pipeline.1} parent=63 // pred_fallthru
        _
    $region64: #{_pipeline.1} parent=5 // pred_fallthru
      _
    %p1588 = scmp.le.s32.totalorder 2, %s28
    // Predicated region
    $region81: #{_pipeline.1} parent=5 // pred_check
      %p1589 = pneg %p1588
    $region82: #{_pipeline.1} parent=5 // pred_check_branch
      %1591 = sbr.rel (%p1589) target = $region84
    $region83: #{_pipeline.1} parent=5 // pred_region
      %s1592 = ssub.s32 %s28, 2
      // Predicated region
      $region85: #{_pipeline.1} parent=83 // pred_check
        %p1593 = pneg %p310
      $region86: #{_pipeline.1} parent=83 // pred_check_branch
        %1595 = sbr.rel (%p1593) target = $region88
      $region87: #{_pipeline.1} parent=83 // pred_region
        %p1596 = scmp.lt.s32.totalorder %s39, 1
        %s1597 = scalar_select %p1596, %s39, 1
        %s1598 = smul.addr %s1597, 8
        %s1599 = smul.addr %s1598, 8
        %s1600 = scalar_lea.vmem %s12, %s1599
      $region88: #{_pipeline.1} parent=83 // pred_fallthru
        _
      // Predicated region
      $region89: #{_pipeline.1} parent=83 // pred_check
        %p1601 = pneg %p336
      $region90: #{_pipeline.1} parent=83 // pred_check_branch
        %1603 = sbr.rel (%p1601) target = $region92
      $region91: #{_pipeline.1} parent=83 // pred_region
        %p1604 = scmp.lt.s32.totalorder %s39, 1
        %s1605 = scalar_select %p1604, %s39, 1
        %s1606 = smul.addr %s1605, 8
        %s1607 = smul.addr %s1606, 8
        %s1608 = scalar_lea.vmem %s13, %s1607
      $region92: #{_pipeline.1} parent=83 // pred_fallthru
        _
    $region84: #{_pipeline.1} parent=5 // pred_fallthru
      _
  $region6: #{_pipeline.1} parent=0 // loop_footer
    %s32 = sadd.s32 1, %s28
  $region7: #{_pipeline.1} parent=0 // loop_footer_branch
    %27 = sbr.rel target = $region3
  $region8: #{_pipeline.1} parent=0 // loop_exit
    _

</llo_original>
